<compile_context>
chip_gen: v7x
topology: tpu7x:2x2x1
jax: 0.10.0
libtpu: 0.0.40
codegen_flags: <defaults>
</compile_context>

<pallas_src>
import functools

import jax
import jax.numpy as jnp
from jax.experimental import pallas as pl

N_EMBD = 32
NUM_HEADS = 4
HEAD_SIZE = 8   # head_size * num_heads == n_embd, matching the proj Linear


def mha_kernel(x_ref, w_ref, b_ref, o_ref, *, B, T, H):
    # x_ref: (B*T, C)        inputs flattened over (batch, seq)
    # w_ref: (2, H, C, C)    [0, h] = scale * Wq_h @ Wk_h^T ; [1, h] = Wv_h @ Wp_h
    # b_ref: (1, C)          output-projection bias
    # o_ref: (B*T, C)
    x2 = x_ref[...]                               # (B*T, C)
    C = x2.shape[-1]
    x3 = x2.reshape(B, T, C)                      # (B, T, C)

    # Additive causal mask, built once (0 on/below diagonal, -1e30 above).
    row = jax.lax.broadcasted_iota(jnp.int32, (T, T), 0)
    col = jax.lax.broadcasted_iota(jnp.int32, (T, T), 1)
    mask = jnp.where(row >= col, jnp.float32(0.0), jnp.float32(-1e30))[None]  # (1, T, T)

    acc = jnp.zeros((B, T, C), jnp.float32)
    for h in range(H):                            # static unroll over heads (H=4)
        a_h = w_ref[0, h]                         # (C, C) leading-axis view, no lane slice
        g_h = w_ref[1, h]                         # (C, C)

        # Pre-multiplied score form: s_h = (x @ A_h) @ x^T, contraction dim = C = 32.
        qa = jnp.dot(x2, a_h, preferred_element_type=jnp.float32).reshape(B, T, C)
        gv = jnp.dot(x2, g_h, preferred_element_type=jnp.float32).reshape(B, T, C)

        s = jnp.einsum('bqc,bkc->bqk', qa, x3,
                       preferred_element_type=jnp.float32)                # (B, T, T)
        s = s + mask
        s = s - jnp.max(s, axis=-1, keepdims=True)
        p = jnp.exp(s)
        p = p * pl.reciprocal(jnp.sum(p, axis=-1, keepdims=True), approx=False)

        # Output projection already folded into gv; accumulate across heads.
        acc = acc + jnp.einsum('bqk,bkc->bqc', p, gv,
                               preferred_element_type=jnp.float32)        # (B, T, C)

    y = acc.reshape(B * T, C) + b_ref[...]
    o_ref[...] = y.astype(o_ref.dtype)


def multi_head_attention(x, wq, wk, wv, Wp, bp):
    """x: (B, T, C); wq/wk/wv: (H, C, hs) (so q = x @ wq[h]); Wp: (C, H*hs) PyTorch
    layout; bp: (C,)."""
    B, T, C = x.shape
    H, _, hs = wq.shape
    scale = jnp.float32(hs) ** -0.5

    # Host-side weight pre-multiplication (mathematically equivalent, f32-exact to ~1e-6):
    #   A_h = scale * Wq_h @ Wk_h^T   and   G_h = Wv_h @ Wp_h
    A = scale * jnp.einsum('hcd,hed->hce', wq, wk)          # (H, C, C)
    Wp_heads = Wp.T.reshape(H, hs, C)                       # per-head proj rows (hs, C)
    G = jnp.einsum('hcd,hde->hce', wv, Wp_heads)            # (H, C, C)
    w_slab = jnp.stack([A, G], axis=0).astype(jnp.float32)  # (2, H, C, C)
    bias = bp.reshape(1, C).astype(jnp.float32)

    x2d = x.reshape(B * T, C)

    y2d = pl.pallas_call(
        functools.partial(mha_kernel, B=B, T=T, H=H),
        out_shape=jax.ShapeDtypeStruct((B * T, C), x.dtype),
        in_specs=[
            pl.BlockSpec((B * T, C), lambda: (0, 0)),              # x (flattened)
            pl.BlockSpec((2, H, C, C), lambda: (0, 0, 0, 0)),      # pre-multiplied weights
            pl.BlockSpec((1, C), lambda: (0, 0)),                  # proj bias
        ],
        out_specs=pl.BlockSpec((B * T, C), lambda: (0, 0)),
    )(x2d, w_slab, bias)
    return y2d.reshape(B, T, C)


def reference_forward(x, wq, wk, wv, Wp, bp):
    """Pure-JAX mirror of the PyTorch forward (eval mode), no reassociation."""
    B, T, C = x.shape
    outs = []
    tril = jnp.tril(jnp.ones((T, T), jnp.float32))
    for h in range(NUM_HEADS):
        q = x @ wq[h]
        k = x @ wk[h]
        v = x @ wv[h]
        wei = q @ jnp.swapaxes(k, -2, -1) * (HEAD_SIZE ** -0.5)
        wei = jnp.where(tril == 0, -jnp.inf, wei)
        wei = jax.nn.softmax(wei, axis=-1)
        outs.append(wei @ v)
    out = jnp.concatenate(outs, axis=-1)     # (B, T, H*hs)
    return out @ Wp.T + bp


if __name__ == "__main__":
    key = jax.random.PRNGKey(0)
    kx, kq, kk, kv, kp, kb = jax.random.split(key, 6)

    B, T = 2, 8                      # T <= 20 (tril buffer size in the module)
    C, H, hs = N_EMBD, NUM_HEADS, HEAD_SIZE

    x = jax.random.normal(kx, (B, T, C), jnp.float32)

    # Deterministic "Linear" weights (bias=False for K/Q/V); stored as (H, C, hs),
    # i.e. transpose of the PyTorch (hs, C) weight so that k = x @ Wk.
    scale_in = 1.0 / jnp.sqrt(jnp.float32(C))
    wq = jax.random.uniform(kq, (H, C, hs), jnp.float32, -scale_in, scale_in)
    wk = jax.random.uniform(kk, (H, C, hs), jnp.float32, -scale_in, scale_in)
    wv = jax.random.uniform(kv, (H, C, hs), jnp.float32, -scale_in, scale_in)

    # proj: Linear(H*hs, n_embd) -> weight (C, H*hs), bias (C,)
    scale_p = 1.0 / jnp.sqrt(jnp.float32(H * hs))
    Wp = jax.random.uniform(kp, (C, H * hs), jnp.float32, -scale_p, scale_p)
    bp = jax.random.uniform(kb, (C,), jnp.float32, -scale_p, scale_p)

    y = multi_head_attention(x, wq, wk, wv, Wp, bp)
    y = jax.block_until_ready(y)

    y_ref = reference_forward(x, wq, wk, wv, Wp, bp)
    assert y.shape == (B, T, C)
    assert jnp.allclose(y, y_ref, atol=1e-4, rtol=1e-4), "mismatch vs reference"

    print("KERNEL_OK")
</pallas_src>

<mosaic_0001>
module attributes {stable_mosaic.version = 11 : i64} {
  func.func @mha_kernel(%arg0: memref<16x32xf32, #tpu.memory_space<vmem>>, %arg1: memref<2x4x32x32xf32, #tpu.memory_space<vmem>>, %arg2: memref<1x32xf32, #tpu.memory_space<vmem>>, %arg3: memref<16x32xf32, #tpu.memory_space<vmem>>) attributes {dimension_semantics = [], scalar_prefetch = 0 : i64, scratch_operands = 0 : i64, tpu.core_type = #tpu.core_type<tc>} {
    %c0 = arith.constant 0 : index
    %c0_0 = arith.constant 0 : index
    %0 = vector.load %arg0[%c0, %c0_0] : memref<16x32xf32, #tpu.memory_space<vmem>>, vector<16x32xf32>
    %1 = vector.shape_cast %0 : vector<16x32xf32> to vector<2x8x32xf32>
    %2 = tpu.iota {dimensions = array<i32: 0>} : vector<8x8xi32>
    %3 = tpu.iota {dimensions = array<i32: 1>} : vector<8x8xi32>
    %4 = arith.cmpi sge, %2, %3 : vector<8x8xi32>
    %cst = arith.constant 0.000000e+00 : f32
    %cst_1 = arith.constant -1.000000e+30 : f32
    %5 = vector.broadcast %cst : f32 to vector<8x8xf32>
    %6 = vector.broadcast %cst_1 : f32 to vector<8x8xf32>
    %7 = arith.select %4, %5, %6 : vector<8x8xi1>, vector<8x8xf32>
    %8 = vector.shape_cast %7 : vector<8x8xf32> to vector<1x8x8xf32>
    %cst_2 = arith.constant 0.000000e+00 : f32
    %9 = vector.broadcast %cst_2 : f32 to vector<2x8x32xf32>
    %c0_3 = arith.constant 0 : index
    %c0_4 = arith.constant 0 : index
    %c0_5 = arith.constant 0 : index
    %c0_6 = arith.constant 0 : index
    %10 = vector.load %arg1[%c0_3, %c0_4, %c0_5, %c0_6] : memref<2x4x32x32xf32, #tpu.memory_space<vmem>>, vector<1x1x32x32xf32>
    %11 = vector.shape_cast %10 : vector<1x1x32x32xf32> to vector<32x32xf32>
    %c1 = arith.constant 1 : index
    %c0_7 = arith.constant 0 : index
    %c0_8 = arith.constant 0 : index
    %c0_9 = arith.constant 0 : index
    %12 = vector.load %arg1[%c1, %c0_7, %c0_8, %c0_9] : memref<2x4x32x32xf32, #tpu.memory_space<vmem>>, vector<1x1x32x32xf32>
    %13 = vector.shape_cast %12 : vector<1x1x32x32xf32> to vector<32x32xf32>
    %cst_10 = arith.constant dense<0.000000e+00> : vector<16x32xf32>
    %14 = tpu.matmul %0, %11, %cst_10 {dimension_numbers = #tpu.dot_dimension_numbers<[1], [0], [0], [1], [0, 0, 1, 1], [], []>} : vector<16x32xf32>, vector<32x32xf32>, vector<16x32xf32> -> vector<16x32xf32>
    %15 = vector.shape_cast %14 : vector<16x32xf32> to vector<2x8x32xf32>
    %cst_11 = arith.constant dense<0.000000e+00> : vector<16x32xf32>
    %16 = tpu.matmul %0, %13, %cst_11 {dimension_numbers = #tpu.dot_dimension_numbers<[1], [0], [0], [1], [0, 0, 1, 1], [], []>} : vector<16x32xf32>, vector<32x32xf32>, vector<16x32xf32> -> vector<16x32xf32>
    %17 = vector.shape_cast %16 : vector<16x32xf32> to vector<2x8x32xf32>
    "tpu.trace_start"() <{level = 10 : i32, message = "bqc,bkc->bqk"}> : () -> ()
    %cst_12 = arith.constant dense<0.000000e+00> : vector<2x8x8xf32>
    %18 = tpu.matmul %15, %1, %cst_12 {dimension_numbers = #tpu.dot_dimension_numbers<[2], [2], [1], [1], [0, 0, 0, 1, 1, 1], [0], [0]>} : vector<2x8x32xf32>, vector<2x8x32xf32>, vector<2x8x8xf32> -> vector<2x8x8xf32>
    "tpu.trace_stop"() : () -> ()
    %19 = vector.broadcast %8 : vector<1x8x8xf32> to vector<2x8x8xf32>
    %20 = arith.addf %18, %19 : vector<2x8x8xf32>
    %cst_13 = arith.constant dense<0xFF800000> : vector<2x8xf32>
    %21 = vector.multi_reduction <maximumf>, %20, %cst_13 [2] : vector<2x8x8xf32> to vector<2x8xf32>
    %22 = vector.shape_cast %21 : vector<2x8xf32> to vector<2x8x1xf32>
    %23 = vector.broadcast %22 : vector<2x8x1xf32> to vector<2x8x8xf32>
    %24 = arith.subf %20, %23 : vector<2x8x8xf32>
    %25 = math.exp %24 : vector<2x8x8xf32>
    %cst_14 = arith.constant dense<0.000000e+00> : vector<2x8xf32>
    %26 = vector.multi_reduction <add>, %25, %cst_14 [2] : vector<2x8x8xf32> to vector<2x8xf32>
    %27 = vector.shape_cast %26 : vector<2x8xf32> to vector<2x8x1xf32>
    %28 = tpu.reciprocal %27 : vector<2x8x1xf32> -> vector<2x8x1xf32>
    %29 = vector.broadcast %28 : vector<2x8x1xf32> to vector<2x8x8xf32>
    %30 = arith.mulf %25, %29 : vector<2x8x8xf32>
    "tpu.trace_start"() <{level = 10 : i32, message = "bqk,bkc->bqc"}> : () -> ()
    %cst_15 = arith.constant dense<0.000000e+00> : vector<2x8x32xf32>
    %31 = tpu.matmul %30, %17, %cst_15 {dimension_numbers = #tpu.dot_dimension_numbers<[2], [1], [1], [2], [0, 0, 0, 1, 1, 2], [0], [0]>} : vector<2x8x8xf32>, vector<2x8x32xf32>, vector<2x8x32xf32> -> vector<2x8x32xf32>
    "tpu.trace_stop"() : () -> ()
    %32 = arith.addf %9, %31 : vector<2x8x32xf32>
    %c0_16 = arith.constant 0 : index
    %c1_17 = arith.constant 1 : index
    %c0_18 = arith.constant 0 : index
    %c0_19 = arith.constant 0 : index
    %33 = vector.load %arg1[%c0_16, %c1_17, %c0_18, %c0_19] : memref<2x4x32x32xf32, #tpu.memory_space<vmem>>, vector<1x1x32x32xf32>
    %34 = vector.shape_cast %33 : vector<1x1x32x32xf32> to vector<32x32xf32>
    %c1_20 = arith.constant 1 : index
    %c1_21 = arith.constant 1 : index
    %c0_22 = arith.constant 0 : index
    %c0_23 = arith.constant 0 : index
    %35 = vector.load %arg1[%c1_20, %c1_21, %c0_22, %c0_23] : memref<2x4x32x32xf32, #tpu.memory_space<vmem>>, vector<1x1x32x32xf32>
    %36 = vector.shape_cast %35 : vector<1x1x32x32xf32> to vector<32x32xf32>
    %cst_24 = arith.constant dense<0.000000e+00> : vector<16x32xf32>
    %37 = tpu.matmul %0, %34, %cst_24 {dimension_numbers = #tpu.dot_dimension_numbers<[1], [0], [0], [1], [0, 0, 1, 1], [], []>} : vector<16x32xf32>, vector<32x32xf32>, vector<16x32xf32> -> vector<16x32xf32>
    %38 = vector.shape_cast %37 : vector<16x32xf32> to vector<2x8x32xf32>
    %cst_25 = arith.constant dense<0.000000e+00> : vector<16x32xf32>
    %39 = tpu.matmul %0, %36, %cst_25 {dimension_numbers = #tpu.dot_dimension_numbers<[1], [0], [0], [1], [0, 0, 1, 1], [], []>} : vector<16x32xf32>, vector<32x32xf32>, vector<16x32xf32> -> vector<16x32xf32>
    %40 = vector.shape_cast %39 : vector<16x32xf32> to vector<2x8x32xf32>
    "tpu.trace_start"() <{level = 10 : i32, message = "bqc,bkc->bqk"}> : () -> ()
    %cst_26 = arith.constant dense<0.000000e+00> : vector<2x8x8xf32>
    %41 = tpu.matmul %38, %1, %cst_26 {dimension_numbers = #tpu.dot_dimension_numbers<[2], [2], [1], [1], [0, 0, 0, 1, 1, 1], [0], [0]>} : vector<2x8x32xf32>, vector<2x8x32xf32>, vector<2x8x8xf32> -> vector<2x8x8xf32>
    "tpu.trace_stop"() : () -> ()
    %42 = vector.broadcast %8 : vector<1x8x8xf32> to vector<2x8x8xf32>
    %43 = arith.addf %41, %42 : vector<2x8x8xf32>
    %cst_27 = arith.constant dense<0xFF800000> : vector<2x8xf32>
    %44 = vector.multi_reduction <maximumf>, %43, %cst_27 [2] : vector<2x8x8xf32> to vector<2x8xf32>
    %45 = vector.shape_cast %44 : vector<2x8xf32> to vector<2x8x1xf32>
    %46 = vector.broadcast %45 : vector<2x8x1xf32> to vector<2x8x8xf32>
    %47 = arith.subf %43, %46 : vector<2x8x8xf32>
    %48 = math.exp %47 : vector<2x8x8xf32>
    %cst_28 = arith.constant dense<0.000000e+00> : vector<2x8xf32>
    %49 = vector.multi_reduction <add>, %48, %cst_28 [2] : vector<2x8x8xf32> to vector<2x8xf32>
    %50 = vector.shape_cast %49 : vector<2x8xf32> to vector<2x8x1xf32>
    %51 = tpu.reciprocal %50 : vector<2x8x1xf32> -> vector<2x8x1xf32>
    %52 = vector.broadcast %51 : vector<2x8x1xf32> to vector<2x8x8xf32>
    %53 = arith.mulf %48, %52 : vector<2x8x8xf32>
    "tpu.trace_start"() <{level = 10 : i32, message = "bqk,bkc->bqc"}> : () -> ()
    %cst_29 = arith.constant dense<0.000000e+00> : vector<2x8x32xf32>
    %54 = tpu.matmul %53, %40, %cst_29 {dimension_numbers = #tpu.dot_dimension_numbers<[2], [1], [1], [2], [0, 0, 0, 1, 1, 2], [0], [0]>} : vector<2x8x8xf32>, vector<2x8x32xf32>, vector<2x8x32xf32> -> vector<2x8x32xf32>
    "tpu.trace_stop"() : () -> ()
    %55 = arith.addf %32, %54 : vector<2x8x32xf32>
    %c0_30 = arith.constant 0 : index
    %c2 = arith.constant 2 : index
    %c0_31 = arith.constant 0 : index
    %c0_32 = arith.constant 0 : index
    %56 = vector.load %arg1[%c0_30, %c2, %c0_31, %c0_32] : memref<2x4x32x32xf32, #tpu.memory_space<vmem>>, vector<1x1x32x32xf32>
    %57 = vector.shape_cast %56 : vector<1x1x32x32xf32> to vector<32x32xf32>
    %c1_33 = arith.constant 1 : index
    %c2_34 = arith.constant 2 : index
    %c0_35 = arith.constant 0 : index
    %c0_36 = arith.constant 0 : index
    %58 = vector.load %arg1[%c1_33, %c2_34, %c0_35, %c0_36] : memref<2x4x32x32xf32, #tpu.memory_space<vmem>>, vector<1x1x32x32xf32>
    %59 = vector.shape_cast %58 : vector<1x1x32x32xf32> to vector<32x32xf32>
    %cst_37 = arith.constant dense<0.000000e+00> : vector<16x32xf32>
    %60 = tpu.matmul %0, %57, %cst_37 {dimension_numbers = #tpu.dot_dimension_numbers<[1], [0], [0], [1], [0, 0, 1, 1], [], []>} : vector<16x32xf32>, vector<32x32xf32>, vector<16x32xf32> -> vector<16x32xf32>
    %61 = vector.shape_cast %60 : vector<16x32xf32> to vector<2x8x32xf32>
    %cst_38 = arith.constant dense<0.000000e+00> : vector<16x32xf32>
    %62 = tpu.matmul %0, %59, %cst_38 {dimension_numbers = #tpu.dot_dimension_numbers<[1], [0], [0], [1], [0, 0, 1, 1], [], []>} : vector<16x32xf32>, vector<32x32xf32>, vector<16x32xf32> -> vector<16x32xf32>
    %63 = vector.shape_cast %62 : vector<16x32xf32> to vector<2x8x32xf32>
    "tpu.trace_start"() <{level = 10 : i32, message = "bqc,bkc->bqk"}> : () -> ()
    %cst_39 = arith.constant dense<0.000000e+00> : vector<2x8x8xf32>
    %64 = tpu.matmul %61, %1, %cst_39 {dimension_numbers = #tpu.dot_dimension_numbers<[2], [2], [1], [1], [0, 0, 0, 1, 1, 1], [0], [0]>} : vector<2x8x32xf32>, vector<2x8x32xf32>, vector<2x8x8xf32> -> vector<2x8x8xf32>
    "tpu.trace_stop"() : () -> ()
    %65 = vector.broadcast %8 : vector<1x8x8xf32> to vector<2x8x8xf32>
    %66 = arith.addf %64, %65 : vector<2x8x8xf32>
    %cst_40 = arith.constant dense<0xFF800000> : vector<2x8xf32>
    %67 = vector.multi_reduction <maximumf>, %66, %cst_40 [2] : vector<2x8x8xf32> to vector<2x8xf32>
    %68 = vector.shape_cast %67 : vector<2x8xf32> to vector<2x8x1xf32>
    %69 = vector.broadcast %68 : vector<2x8x1xf32> to vector<2x8x8xf32>
    %70 = arith.subf %66, %69 : vector<2x8x8xf32>
    %71 = math.exp %70 : vector<2x8x8xf32>
    %cst_41 = arith.constant dense<0.000000e+00> : vector<2x8xf32>
    %72 = vector.multi_reduction <add>, %71, %cst_41 [2] : vector<2x8x8xf32> to vector<2x8xf32>
    %73 = vector.shape_cast %72 : vector<2x8xf32> to vector<2x8x1xf32>
    %74 = tpu.reciprocal %73 : vector<2x8x1xf32> -> vector<2x8x1xf32>
    %75 = vector.broadcast %74 : vector<2x8x1xf32> to vector<2x8x8xf32>
    %76 = arith.mulf %71, %75 : vector<2x8x8xf32>
    "tpu.trace_start"() <{level = 10 : i32, message = "bqk,bkc->bqc"}> : () -> ()
    %cst_42 = arith.constant dense<0.000000e+00> : vector<2x8x32xf32>
    %77 = tpu.matmul %76, %63, %cst_42 {dimension_numbers = #tpu.dot_dimension_numbers<[2], [1], [1], [2], [0, 0, 0, 1, 1, 2], [0], [0]>} : vector<2x8x8xf32>, vector<2x8x32xf32>, vector<2x8x32xf32> -> vector<2x8x32xf32>
    "tpu.trace_stop"() : () -> ()
    %78 = arith.addf %55, %77 : vector<2x8x32xf32>
    %c0_43 = arith.constant 0 : index
    %c3 = arith.constant 3 : index
    %c0_44 = arith.constant 0 : index
    %c0_45 = arith.constant 0 : index
    %79 = vector.load %arg1[%c0_43, %c3, %c0_44, %c0_45] : memref<2x4x32x32xf32, #tpu.memory_space<vmem>>, vector<1x1x32x32xf32>
    %80 = vector.shape_cast %79 : vector<1x1x32x32xf32> to vector<32x32xf32>
    %c1_46 = arith.constant 1 : index
    %c3_47 = arith.constant 3 : index
    %c0_48 = arith.constant 0 : index
    %c0_49 = arith.constant 0 : index
    %81 = vector.load %arg1[%c1_46, %c3_47, %c0_48, %c0_49] : memref<2x4x32x32xf32, #tpu.memory_space<vmem>>, vector<1x1x32x32xf32>
    %82 = vector.shape_cast %81 : vector<1x1x32x32xf32> to vector<32x32xf32>
    %cst_50 = arith.constant dense<0.000000e+00> : vector<16x32xf32>
    %83 = tpu.matmul %0, %80, %cst_50 {dimension_numbers = #tpu.dot_dimension_numbers<[1], [0], [0], [1], [0, 0, 1, 1], [], []>} : vector<16x32xf32>, vector<32x32xf32>, vector<16x32xf32> -> vector<16x32xf32>
    %84 = vector.shape_cast %83 : vector<16x32xf32> to vector<2x8x32xf32>
    %cst_51 = arith.constant dense<0.000000e+00> : vector<16x32xf32>
    %85 = tpu.matmul %0, %82, %cst_51 {dimension_numbers = #tpu.dot_dimension_numbers<[1], [0], [0], [1], [0, 0, 1, 1], [], []>} : vector<16x32xf32>, vector<32x32xf32>, vector<16x32xf32> -> vector<16x32xf32>
    %86 = vector.shape_cast %85 : vector<16x32xf32> to vector<2x8x32xf32>
    "tpu.trace_start"() <{level = 10 : i32, message = "bqc,bkc->bqk"}> : () -> ()
    %cst_52 = arith.constant dense<0.000000e+00> : vector<2x8x8xf32>
    %87 = tpu.matmul %84, %1, %cst_52 {dimension_numbers = #tpu.dot_dimension_numbers<[2], [2], [1], [1], [0, 0, 0, 1, 1, 1], [0], [0]>} : vector<2x8x32xf32>, vector<2x8x32xf32>, vector<2x8x8xf32> -> vector<2x8x8xf32>
    "tpu.trace_stop"() : () -> ()
    %88 = vector.broadcast %8 : vector<1x8x8xf32> to vector<2x8x8xf32>
    %89 = arith.addf %87, %88 : vector<2x8x8xf32>
    %cst_53 = arith.constant dense<0xFF800000> : vector<2x8xf32>
    %90 = vector.multi_reduction <maximumf>, %89, %cst_53 [2] : vector<2x8x8xf32> to vector<2x8xf32>
    %91 = vector.shape_cast %90 : vector<2x8xf32> to vector<2x8x1xf32>
    %92 = vector.broadcast %91 : vector<2x8x1xf32> to vector<2x8x8xf32>
    %93 = arith.subf %89, %92 : vector<2x8x8xf32>
    %94 = math.exp %93 : vector<2x8x8xf32>
    %cst_54 = arith.constant dense<0.000000e+00> : vector<2x8xf32>
    %95 = vector.multi_reduction <add>, %94, %cst_54 [2] : vector<2x8x8xf32> to vector<2x8xf32>
    %96 = vector.shape_cast %95 : vector<2x8xf32> to vector<2x8x1xf32>
    %97 = tpu.reciprocal %96 : vector<2x8x1xf32> -> vector<2x8x1xf32>
    %98 = vector.broadcast %97 : vector<2x8x1xf32> to vector<2x8x8xf32>
    %99 = arith.mulf %94, %98 : vector<2x8x8xf32>
    "tpu.trace_start"() <{level = 10 : i32, message = "bqk,bkc->bqc"}> : () -> ()
    %cst_55 = arith.constant dense<0.000000e+00> : vector<2x8x32xf32>
    %100 = tpu.matmul %99, %86, %cst_55 {dimension_numbers = #tpu.dot_dimension_numbers<[2], [1], [1], [2], [0, 0, 0, 1, 1, 2], [0], [0]>} : vector<2x8x8xf32>, vector<2x8x32xf32>, vector<2x8x32xf32> -> vector<2x8x32xf32>
    "tpu.trace_stop"() : () -> ()
    %101 = arith.addf %78, %100 : vector<2x8x32xf32>
    %102 = vector.shape_cast %101 : vector<2x8x32xf32> to vector<16x32xf32>
    %c0_56 = arith.constant 0 : index
    %c0_57 = arith.constant 0 : index
    %103 = vector.load %arg2[%c0_56, %c0_57] : memref<1x32xf32, #tpu.memory_space<vmem>>, vector<1x32xf32>
    %104 = vector.broadcast %103 : vector<1x32xf32> to vector<16x32xf32>
    %105 = arith.addf %102, %104 : vector<16x32xf32>
    %c0_58 = arith.constant 0 : index
    %c0_59 = arith.constant 0 : index
    %106 = vector.load %arg3[%c0_58, %c0_59] : memref<16x32xf32, #tpu.memory_space<vmem>>, vector<16x32xf32>
    tpu.vector_store %arg3[%c0_58, %c0_59], %105 {strides = array<i32>} : memref<16x32xf32, #tpu.memory_space<vmem>>, vector<16x32xf32>,
    return
  }
}

</mosaic_0001>

<llo_original>
// kernel: tpu_custom_call.1
$region0: #{tpu_custom_call.1}
  #allocation0 [shape = 'u32[]', space=smem, size = 0x4, offset = 0x4, fixed_abs, tag = 'smem constant byte address 0x4 - core index']
  #allocation1 [shape = 'u32[144,128]{1,0:T(1,128)}', space=vmem, size = 0x12000, scoped, tag = 'internal scratch']
  %s0 = inlined_call_operand.hbm [shape: f32[16,32], index: 0, kind: input, shape index: {}]
  %s1 = inlined_call_operand.hbm [shape: f32[2,4,32,32], index: 1, kind: input, shape index: {}]
  %s2 = inlined_call_operand.vmem [shape: f32[1,32], index: 2, kind: input, shape index: {}]
  %s3 = inlined_call_operand.hbm [shape: f32[16,32], index: 3, kind: output, shape index: {}]
  %s4 = sld [smem:[#allocation0]]
  $region30: #{tpu_custom_call.1} parent=0
    _
  %s6 = ssub.s32 1, %s4
  %s7 = scalar_select 0, %s6, %s4
  $region1: #{tpu_custom_call.1} parent=0
    #allocation2 [shape = 'u8[8192]{0}', space=vmem, size = 0x2000, scoped, tag = 'input window, operand 0, single buffered']
    #allocation3 [shape = 's32[1]{0}', space=sflag, size = 0x4, scoped, tag = 'scoped memory for tpu_custom_call.1']
    #allocation4 [shape = 's32[1]{0}', space=sflag, size = 0x4, scoped, tag = 'scoped memory for tpu_custom_call.1']
    #allocation5 [shape = 'u8[131072]{0}', space=vmem, size = 0x20000, scoped, tag = 'input window, operand 1, single buffered']
    #allocation6 [shape = 's32[1]{0}', space=sflag, size = 0x4, scoped, tag = 'scoped memory for tpu_custom_call.1']
    #allocation7 [shape = 'u8[8192]{0}', space=vmem, size = 0x2000, scoped, tag = 'output window, operand 0, single buffered']
    %8 = vsyncpa [#allocation3], 0
    %9 = vsyncpa [#allocation6], 0
    %10 = vsyncpa [#allocation4], 0
    // Predicated region
    $region2: #{tpu_custom_call.1} parent=1 // pred_check
      _
    $region3: #{tpu_custom_call.1} parent=1 // pred_check_branch
      %12 = sbr.rel (0) target = $region5
    $region4: #{tpu_custom_call.1} parent=1 // pred_region
      %s14 = ssub.s32 256, 256
      %15 = vsyncadd [#allocation3], %s14
      %s16 = sshll.u32 [#allocation2], 4
      %s17 = int_to_ptr.vmem [resolvable:$true] %s16
      %22 = dma.hbm_to_vmem [thread:$0]  %s0, 256, %s17, [#allocation3], 128, 128, 8
    $region5: #{tpu_custom_call.1} parent=1 // pred_fallthru
      _
    // Predicated region
    $region6: #{tpu_custom_call.1} parent=1 // pred_check
      _
    $region7: #{tpu_custom_call.1} parent=1 // pred_check_branch
      %24 = sbr.rel (0) target = $region9
    $region8: #{tpu_custom_call.1} parent=1 // pred_region
      %s26 = ssub.s32 4096, 4096
      %27 = vsyncadd [#allocation6], %s26
      %s28 = sshll.u32 [#allocation5], 4
      %s29 = int_to_ptr.vmem [resolvable:$true] %s28
      %34 = dma.hbm_to_vmem [thread:$0]  %s1, 4096, %s29, [#allocation6], 128, 128, 8
    $region9: #{tpu_custom_call.1} parent=1 // pred_fallthru
      _
    // Predicated region
    $region10: #{tpu_custom_call.1} parent=1 // pred_check
      _
    $region11: #{tpu_custom_call.1} parent=1 // pred_check_branch
      %36 = sbr.rel (0) target = $region13
    $region12: #{tpu_custom_call.1} parent=1 // pred_region
      _
    $region13: #{tpu_custom_call.1} parent=1 // pred_fallthru
      _
    // Predicated region
    $region14: #{tpu_custom_call.1} parent=1 // pred_check
      _
    $region15: #{tpu_custom_call.1} parent=1 // pred_check_branch
      %38 = sbr.rel (0) target = $region17
    $region16: #{tpu_custom_call.1} parent=1 // pred_region
      %39 = dma.done [#allocation3], 256
    $region17: #{tpu_custom_call.1} parent=1 // pred_fallthru
      _
    // Predicated region
    $region18: #{tpu_custom_call.1} parent=1 // pred_check
      _
    $region19: #{tpu_custom_call.1} parent=1 // pred_check_branch
      %41 = sbr.rel (0) target = $region21
    $region20: #{tpu_custom_call.1} parent=1 // pred_region
      %42 = dma.done [#allocation6], 4096
    $region21: #{tpu_custom_call.1} parent=1 // pred_fallthru
      _
    %v43 = vld [vmem:[#allocation2] sm:$0xff]
    %v44 = vld [vmem:[#allocation2 + $0x8] sm:$0xff]
    %v45 = vlaneseq
    %v46 = vshrl.u32 %v45, 7
    %v47 = vlaneseq
    %v48 = vand.u32 %v47, 127
    %vm49 = vcmp.ge.s32.totalorder %v46, %v48
    %v50 = vsel %vm49, 0.0, -1e+30
    %v51 = vld [vmem:[#allocation5] sm:$0xff]
    %v52 = vld [vmem:[#allocation5 + $0x8] sm:$0xff]
    %v53 = vld [vmem:[#allocation5 + $0x10] sm:$0xff]
    %v54 = vld [vmem:[#allocation5 + $0x18] sm:$0xff]
    %s55 = scalar_lea.vmem [#allocation5], 128
    %v56 = vld [vmem:[%s55] sm:$0xff]
    %v57 = vld [vmem:[%s55 + $0x8] sm:$0xff]
    %v58 = vld [vmem:[%s55 + $0x10] sm:$0xff]
    %v59 = vld [vmem:[%s55 + $0x18] sm:$0xff]
    %vm60 = vcmask 261120
    %v62 = vsel %vm60, %v43, 0
    %v65 = vsel %vm60, %v44, 0
    %67 = vmatprep.subr.mxu0 0.0
    %68 = vmatpush1.msra.mxu0 %v51
    %69 = vmatprep.subr.mxu0 0.0
    %70 = vmatpush1.msra.mxu0 %v52
    %71 = vmatprep.subr.mxu0 0.0
    %72 = vmatpush1.msra.mxu0 %v53
    %73 = vmatprep.subr.mxu0 0.0
    %74 = vmatpush1.msra.mxu0 %v54
    %75 = vmatprep.subr.mxu0 0.0
    %76 = vmatpush1.msra.mxu0 0.0
    %77 = vmatprep.subr.mxu0 0.0
    %78 = vmatpush1.msra.mxu0 0.0
    %79 = vmatprep.subr.mxu0 0.0
    %80 = vmatpush1.msra.mxu0 0.0
    %81 = vmatprep.subr.mxu0 0.0
    %82 = vmatpush1.msra.mxu0 0.0
    %83 = vmatprep.subr.mxu0 0.0
    %84 = vmatpush1.msra.mxu0 0.0
    %85 = vmatprep.subr.mxu0 0.0
    %86 = vmatpush1.msra.mxu0 0.0
    %87 = vmatprep.subr.mxu0 0.0
    %88 = vmatpush1.msra.mxu0 0.0
    %89 = vmatprep.subr.mxu0 0.0
    %90 = vmatpush1.msra.mxu0 0.0
    %91 = vmatprep.subr.mxu0 0.0
    %92 = vmatpush1.msra.mxu0 0.0
    %93 = vmatprep.subr.mxu0 0.0
    %94 = vmatpush1.msra.mxu0 0.0
    %95 = vmatprep.subr.mxu0 0.0
    %96 = vmatpush1.msra.mxu0 0.0
    %97 = vmatprep.subr.mxu0 0.0
    %98 = vmatpush1.msra.mxu0 0.0
    %99 = vmatprep.subr.mxu0 0.0
    %100 = vmatpush1.msra.mxu0 0.0
    %101 = vmatprep.subr.mxu0 0.0
    %102 = vmatpush1.msra.mxu0 0.0
    %103 = vmatprep.subr.mxu0 0.0
    %104 = vmatpush1.msra.mxu0 0.0
    %105 = vmatprep.subr.mxu0 0.0
    %106 = vmatpush1.msra.mxu0 0.0
    %107 = vmatprep.subr.mxu0 0.0
    %108 = vmatpush1.msra.mxu0 0.0
    %109 = vmatprep.subr.mxu0 0.0
    %110 = vmatpush1.msra.mxu0 0.0
    %111 = vmatprep.subr.mxu0 0.0
    %112 = vmatpush1.msra.mxu0 0.0
    %113 = vmatprep.subr.mxu0 0.0
    %114 = vmatpush1.msra.mxu0 0.0
    %115 = vmatprep.subr.mxu0 0.0
    %116 = vmatpush1.msra.mxu0 0.0
    %117 = vmatprep.subr.mxu0 0.0
    %118 = vmatpush1.msra.mxu0 0.0
    %119 = vmatprep.subr.mxu0 0.0
    %120 = vmatpush1.msra.mxu0 0.0
    %121 = vmatprep.subr.mxu0 0.0
    %122 = vmatpush1.msra.mxu0 0.0
    %123 = vmatprep.subr.mxu0 0.0
    %124 = vmatpush1.msra.mxu0 0.0
    %125 = vmatprep.subr.mxu0 0.0
    %126 = vmatpush1.msra.mxu0 0.0
    %127 = vmatprep.subr.mxu0 0.0
    %128 = vmatpush1.msra.mxu0 0.0
    %129 = vmatprep.subr.mxu0 0.0
    %130 = vmatpush1.msra.mxu0 0.0
    %131 = vmatprep.mubr.f32.mxu0 0.0
    %132 = vmatmul.mubr.f32.gmra.mrb[0].mxu0 %v62
    %v133 = vpop.f32.mrb[0].mxu0
    %v134 = vadd.f32 0.0, %v133
    %v135 = vpop.f32.mrb[0].mxu0
    %136 = vmatprep.mubr.f32.mxu0 0.0
    %137 = vmatmul.mubr.f32.gmra.mrb[0].mxu0 %v65
    %v138 = vpop.f32.mrb[0].mxu0
    %v139 = vadd.f32 0.0, %v138
    %v140 = vpop.f32.mrb[0].mxu0
    %141 = vdwg.mxu0
    %142 = vmatprep.subr.mxu0 0.0
    %143 = vmatpush1.msra.mxu0 %v56
    %144 = vmatprep.subr.mxu0 0.0
    %145 = vmatpush1.msra.mxu0 %v57
    %146 = vmatprep.subr.mxu0 0.0
    %147 = vmatpush1.msra.mxu0 %v58
    %148 = vmatprep.subr.mxu0 0.0
    %149 = vmatpush1.msra.mxu0 %v59
    %150 = vmatprep.subr.mxu0 0.0
    %151 = vmatpush1.msra.mxu0 0.0
    %152 = vmatprep.subr.mxu0 0.0
    %153 = vmatpush1.msra.mxu0 0.0
    %154 = vmatprep.subr.mxu0 0.0
    %155 = vmatpush1.msra.mxu0 0.0
    %156 = vmatprep.subr.mxu0 0.0
    %157 = vmatpush1.msra.mxu0 0.0
    %158 = vmatprep.subr.mxu0 0.0
    %159 = vmatpush1.msra.mxu0 0.0
    %160 = vmatprep.subr.mxu0 0.0
    %161 = vmatpush1.msra.mxu0 0.0
    %162 = vmatprep.subr.mxu0 0.0
    %163 = vmatpush1.msra.mxu0 0.0
    %164 = vmatprep.subr.mxu0 0.0
    %165 = vmatpush1.msra.mxu0 0.0
    %166 = vmatprep.subr.mxu0 0.0
    %167 = vmatpush1.msra.mxu0 0.0
    %168 = vmatprep.subr.mxu0 0.0
    %169 = vmatpush1.msra.mxu0 0.0
    %170 = vmatprep.subr.mxu0 0.0
    %171 = vmatpush1.msra.mxu0 0.0
    %172 = vmatprep.subr.mxu0 0.0
    %173 = vmatpush1.msra.mxu0 0.0
    %174 = vmatprep.subr.mxu0 0.0
    %175 = vmatpush1.msra.mxu0 0.0
    %176 = vmatprep.subr.mxu0 0.0
    %177 = vmatpush1.msra.mxu0 0.0
    %178 = vmatprep.subr.mxu0 0.0
    %179 = vmatpush1.msra.mxu0 0.0
    %180 = vmatprep.subr.mxu0 0.0
    %181 = vmatpush1.msra.mxu0 0.0
    %182 = vmatprep.subr.mxu0 0.0
    %183 = vmatpush1.msra.mxu0 0.0
    %184 = vmatprep.subr.mxu0 0.0
    %185 = vmatpush1.msra.mxu0 0.0
    %186 = vmatprep.subr.mxu0 0.0
    %187 = vmatpush1.msra.mxu0 0.0
    %188 = vmatprep.subr.mxu0 0.0
    %189 = vmatpush1.msra.mxu0 0.0
    %190 = vmatprep.subr.mxu0 0.0
    %191 = vmatpush1.msra.mxu0 0.0
    %192 = vmatprep.subr.mxu0 0.0
    %193 = vmatpush1.msra.mxu0 0.0
    %194 = vmatprep.subr.mxu0 0.0
    %195 = vmatpush1.msra.mxu0 0.0
    %196 = vmatprep.subr.mxu0 0.0
    %197 = vmatpush1.msra.mxu0 0.0
    %198 = vmatprep.subr.mxu0 0.0
    %199 = vmatpush1.msra.mxu0 0.0
    %200 = vmatprep.subr.mxu0 0.0
    %201 = vmatpush1.msra.mxu0 0.0
    %202 = vmatprep.subr.mxu0 0.0
    %203 = vmatpush1.msra.mxu0 0.0
    %204 = vmatprep.subr.mxu0 0.0
    %205 = vmatpush1.msra.mxu0 0.0
    %206 = vmatprep.mubr.f32.mxu0 0.0
    %207 = vmatmul.mubr.f32.gmra.mrb[0].mxu0 %v62
    %v208 = vpop.f32.mrb[0].mxu0
    %v209 = vadd.f32 0.0, %v208
    %v210 = vpop.f32.mrb[0].mxu0
    %211 = vmatprep.mubr.f32.mxu0 0.0
    %212 = vmatmul.mubr.f32.gmra.mrb[0].mxu0 %v65
    %v213 = vpop.f32.mrb[0].mxu0
    %v214 = vadd.f32 0.0, %v213
    %v215 = vpop.f32.mrb[0].mxu0
    %216 = vdwg.mxu0
    %v218 = vsel %vm60, %v134, 0
    %220 = vmatprep.subr.mxu0 0.0
    %221 = vmatpush1.xpose.msra.mxu0 %v62
    %222 = vmatprep.subr.mxu0 0.0
    %223 = vmatpush1.xpose.msra.mxu0 0.0
    %224 = vmatprep.subr.mxu0 0.0
    %225 = vmatpush1.xpose.msra.mxu0 0.0
    %226 = vmatprep.subr.mxu0 0.0
    %227 = vmatpush1.xpose.msra.mxu0 0.0
    %228 = vmatprep.subr.mxu0 0.0
    %229 = vmatpush1.xpose.msra.mxu0 0.0
    %230 = vmatprep.subr.mxu0 0.0
    %231 = vmatpush1.xpose.msra.mxu0 0.0
    %232 = vmatprep.subr.mxu0 0.0
    %233 = vmatpush1.xpose.msra.mxu0 0.0
    %234 = vmatprep.subr.mxu0 0.0
    %235 = vmatpush1.xpose.msra.mxu0 0.0
    %236 = vmatprep.subr.mxu0 0.0
    %237 = vmatpush1.xpose.msra.mxu0 0.0
    %238 = vmatprep.subr.mxu0 0.0
    %239 = vmatpush1.xpose.msra.mxu0 0.0
    %240 = vmatprep.subr.mxu0 0.0
    %241 = vmatpush1.xpose.msra.mxu0 0.0
    %242 = vmatprep.subr.mxu0 0.0
    %243 = vmatpush1.xpose.msra.mxu0 0.0
    %244 = vmatprep.subr.mxu0 0.0
    %245 = vmatpush1.xpose.msra.mxu0 0.0
    %246 = vmatprep.subr.mxu0 0.0
    %247 = vmatpush1.xpose.msra.mxu0 0.0
    %248 = vmatprep.subr.mxu0 0.0
    %249 = vmatpush1.xpose.msra.mxu0 0.0
    %250 = vmatprep.subr.mxu0 0.0
    %251 = vmatpush1.xpose.msra.mxu0 0.0
    %252 = vmatprep.subr.mxu0 0.0
    %253 = vmatpush1.xpose.msra.mxu0 0.0
    %254 = vmatprep.subr.mxu0 0.0
    %255 = vmatpush1.xpose.msra.mxu0 0.0
    %256 = vmatprep.subr.mxu0 0.0
    %257 = vmatpush1.xpose.msra.mxu0 0.0
    %258 = vmatprep.subr.mxu0 0.0
    %259 = vmatpush1.xpose.msra.mxu0 0.0
    %260 = vmatprep.subr.mxu0 0.0
    %261 = vmatpush1.xpose.msra.mxu0 0.0
    %262 = vmatprep.subr.mxu0 0.0
    %263 = vmatpush1.xpose.msra.mxu0 0.0
    %264 = vmatprep.subr.mxu0 0.0
    %265 = vmatpush1.xpose.msra.mxu0 0.0
    %266 = vmatprep.subr.mxu0 0.0
    %267 = vmatpush1.xpose.msra.mxu0 0.0
    %268 = vmatprep.subr.mxu0 0.0
    %269 = vmatpush1.xpose.msra.mxu0 0.0
    %270 = vmatprep.subr.mxu0 0.0
    %271 = vmatpush1.xpose.msra.mxu0 0.0
    %272 = vmatprep.subr.mxu0 0.0
    %273 = vmatpush1.xpose.msra.mxu0 0.0
    %274 = vmatprep.subr.mxu0 0.0
    %275 = vmatpush1.xpose.msra.mxu0 0.0
    %276 = vmatprep.subr.mxu0 0.0
    %277 = vmatpush1.xpose.msra.mxu0 0.0
    %278 = vmatprep.subr.mxu0 0.0
    %279 = vmatpush1.xpose.msra.mxu0 0.0
    %280 = vmatprep.subr.mxu0 0.0
    %281 = vmatpush1.xpose.msra.mxu0 0.0
    %282 = vmatprep.subr.mxu0 0.0
    %283 = vmatpush1.xpose.msra.mxu0 0.0
    %284 = vmatprep.mubr.f32.mxu0 0.0
    %285 = vmatmul.mubr.f32.gmra.mrb[0].mxu0 %v218
    %v286 = vpop.f32.mrb[0].mxu0
    %v287 = vadd.f32 %v50, %v286
    %v288 = vpop.f32.mrb[0].mxu0
    %289 = vdwg.mxu0
    %v291 = vsel %vm60, %v139, 0
    %293 = vmatprep.subr.mxu0 0.0
    %294 = vmatpush1.xpose.msra.mxu0 %v65
    %295 = vmatprep.subr.mxu0 0.0
    %296 = vmatpush1.xpose.msra.mxu0 0.0
    %297 = vmatprep.subr.mxu0 0.0
    %298 = vmatpush1.xpose.msra.mxu0 0.0
    %299 = vmatprep.subr.mxu0 0.0
    %300 = vmatpush1.xpose.msra.mxu0 0.0
    %301 = vmatprep.subr.mxu0 0.0
    %302 = vmatpush1.xpose.msra.mxu0 0.0
    %303 = vmatprep.subr.mxu0 0.0
    %304 = vmatpush1.xpose.msra.mxu0 0.0
    %305 = vmatprep.subr.mxu0 0.0
    %306 = vmatpush1.xpose.msra.mxu0 0.0
    %307 = vmatprep.subr.mxu0 0.0
    %308 = vmatpush1.xpose.msra.mxu0 0.0
    %309 = vmatprep.subr.mxu0 0.0
    %310 = vmatpush1.xpose.msra.mxu0 0.0
    %311 = vmatprep.subr.mxu0 0.0
    %312 = vmatpush1.xpose.msra.mxu0 0.0
    %313 = vmatprep.subr.mxu0 0.0
    %314 = vmatpush1.xpose.msra.mxu0 0.0
    %315 = vmatprep.subr.mxu0 0.0
    %316 = vmatpush1.xpose.msra.mxu0 0.0
    %317 = vmatprep.subr.mxu0 0.0
    %318 = vmatpush1.xpose.msra.mxu0 0.0
    %319 = vmatprep.subr.mxu0 0.0
    %320 = vmatpush1.xpose.msra.mxu0 0.0
    %321 = vmatprep.subr.mxu0 0.0
    %322 = vmatpush1.xpose.msra.mxu0 0.0
    %323 = vmatprep.subr.mxu0 0.0
    %324 = vmatpush1.xpose.msra.mxu0 0.0
    %325 = vmatprep.subr.mxu0 0.0
    %326 = vmatpush1.xpose.msra.mxu0 0.0
    %327 = vmatprep.subr.mxu0 0.0
    %328 = vmatpush1.xpose.msra.mxu0 0.0
    %329 = vmatprep.subr.mxu0 0.0
    %330 = vmatpush1.xpose.msra.mxu0 0.0
    %331 = vmatprep.subr.mxu0 0.0
    %332 = vmatpush1.xpose.msra.mxu0 0.0
    %333 = vmatprep.subr.mxu0 0.0
    %334 = vmatpush1.xpose.msra.mxu0 0.0
    %335 = vmatprep.subr.mxu0 0.0
    %336 = vmatpush1.xpose.msra.mxu0 0.0
    %337 = vmatprep.subr.mxu0 0.0
    %338 = vmatpush1.xpose.msra.mxu0 0.0
    %339 = vmatprep.subr.mxu0 0.0
    %340 = vmatpush1.xpose.msra.mxu0 0.0
    %341 = vmatprep.subr.mxu0 0.0
    %342 = vmatpush1.xpose.msra.mxu0 0.0
    %343 = vmatprep.subr.mxu0 0.0
    %344 = vmatpush1.xpose.msra.mxu0 0.0
    %345 = vmatprep.subr.mxu0 0.0
    %346 = vmatpush1.xpose.msra.mxu0 0.0
    %347 = vmatprep.subr.mxu0 0.0
    %348 = vmatpush1.xpose.msra.mxu0 0.0
    %349 = vmatprep.subr.mxu0 0.0
    %350 = vmatpush1.xpose.msra.mxu0 0.0
    %351 = vmatprep.subr.mxu0 0.0
    %352 = vmatpush1.xpose.msra.mxu0 0.0
    %353 = vmatprep.subr.mxu0 0.0
    %354 = vmatpush1.xpose.msra.mxu0 0.0
    %355 = vmatprep.subr.mxu0 0.0
    %356 = vmatpush1.xpose.msra.mxu0 0.0
    %357 = vmatprep.mubr.f32.mxu0 0.0
    %358 = vmatmul.mubr.f32.gmra.mrb[0].mxu0 %v291
    %v359 = vpop.f32.mrb[0].mxu0
    %v360 = vadd.f32 %v50, %v359
    %v361 = vpop.f32.mrb[0].mxu0
    %362 = vdwg.mxu0
    %vm363 = vcmask 64512
    %v364 = vsel %vm363, %v287, -inf
    %365 = vmax.xlane.f32.xlu0 %v364
    %v366 = vpop.xlane.xlu0 %365
    %v367 = vsel %vm363, %v360, -inf
    %368 = vmax.xlane.f32.xlu0 %v367
    %v369 = vpop.xlane.xlu0 %368
    %v370 = vsub.f32 %v287, %v366
    %v371 = vsub.f32 %v360, %v369
    %v372 = vmul.f32 %v370, 1.442695
    %v373 = vpow.pop %v372
    %v374 = vmul.f32 %v371, 1.442695
    %v375 = vpow.pop %v374
    %v376 = vsel %vm363, %v373, 0.0
    %377 = vadd.xlane.f32.xlu0 %v376
    %v378 = vpop.xlane.xlu0 %377
    %v379 = vsel %vm363, %v375, 0.0
    %380 = vadd.xlane.f32.xlu0 %v379
    %v381 = vpop.xlane.xlu0 %380
    %v382 = vrcp.pop %v378
    %v383 = vrcp.pop %v381
    %v384 = vmul.f32 %v373, %v382
    %v385 = vmul.f32 %v375, %v383
    %s386 = scalar_lea.vmem [#allocation5], 32
    %v387 = vld [vmem:[%s386] sm:$0xff]
    %v388 = vld [vmem:[%s386 + $0x8] sm:$0xff]
    %v389 = vld [vmem:[%s386 + $0x10] sm:$0xff]
    %v390 = vld [vmem:[%s386 + $0x18] sm:$0xff]
    %s391 = scalar_lea.vmem [#allocation5], 160
    %v392 = vld [vmem:[%s391] sm:$0xff]
    %v393 = vld [vmem:[%s391 + $0x8] sm:$0xff]
    %v394 = vld [vmem:[%s391 + $0x10] sm:$0xff]
    %v395 = vld [vmem:[%s391 + $0x18] sm:$0xff]
    %396 = vmatprep.subr.mxu0 0.0
    %397 = vmatpush1.msra.mxu0 %v387
    %398 = vmatprep.subr.mxu0 0.0
    %399 = vmatpush1.msra.mxu0 %v388
    %400 = vmatprep.subr.mxu0 0.0
    %401 = vmatpush1.msra.mxu0 %v389
    %402 = vmatprep.subr.mxu0 0.0
    %403 = vmatpush1.msra.mxu0 %v390
    %404 = vmatprep.subr.mxu0 0.0
    %405 = vmatpush1.msra.mxu0 0.0
    %406 = vmatprep.subr.mxu0 0.0
    %407 = vmatpush1.msra.mxu0 0.0
    %408 = vmatprep.subr.mxu0 0.0
    %409 = vmatpush1.msra.mxu0 0.0
    %410 = vmatprep.subr.mxu0 0.0
    %411 = vmatpush1.msra.mxu0 0.0
    %412 = vmatprep.subr.mxu0 0.0
    %413 = vmatpush1.msra.mxu0 0.0
    %414 = vmatprep.subr.mxu0 0.0
    %415 = vmatpush1.msra.mxu0 0.0
    %416 = vmatprep.subr.mxu0 0.0
    %417 = vmatpush1.msra.mxu0 0.0
    %418 = vmatprep.subr.mxu0 0.0
    %419 = vmatpush1.msra.mxu0 0.0
    %420 = vmatprep.subr.mxu0 0.0
    %421 = vmatpush1.msra.mxu0 0.0
    %422 = vmatprep.subr.mxu0 0.0
    %423 = vmatpush1.msra.mxu0 0.0
    %424 = vmatprep.subr.mxu0 0.0
    %425 = vmatpush1.msra.mxu0 0.0
    %426 = vmatprep.subr.mxu0 0.0
    %427 = vmatpush1.msra.mxu0 0.0
    %428 = vmatprep.subr.mxu0 0.0
    %429 = vmatpush1.msra.mxu0 0.0
    %430 = vmatprep.subr.mxu0 0.0
    %431 = vmatpush1.msra.mxu0 0.0
    %432 = vmatprep.subr.mxu0 0.0
    %433 = vmatpush1.msra.mxu0 0.0
    %434 = vmatprep.subr.mxu0 0.0
    %435 = vmatpush1.msra.mxu0 0.0
    %436 = vmatprep.subr.mxu0 0.0
    %437 = vmatpush1.msra.mxu0 0.0
    %438 = vmatprep.subr.mxu0 0.0
    %439 = vmatpush1.msra.mxu0 0.0
    %440 = vmatprep.subr.mxu0 0.0
    %441 = vmatpush1.msra.mxu0 0.0
    %442 = vmatprep.subr.mxu0 0.0
    %443 = vmatpush1.msra.mxu0 0.0
    %444 = vmatprep.subr.mxu0 0.0
    %445 = vmatpush1.msra.mxu0 0.0
    %446 = vmatprep.subr.mxu0 0.0
    %447 = vmatpush1.msra.mxu0 0.0
    %448 = vmatprep.subr.mxu0 0.0
    %449 = vmatpush1.msra.mxu0 0.0
    %450 = vmatprep.subr.mxu0 0.0
    %451 = vmatpush1.msra.mxu0 0.0
    %452 = vmatprep.subr.mxu0 0.0
    %453 = vmatpush1.msra.mxu0 0.0
    %454 = vmatprep.subr.mxu0 0.0
    %455 = vmatpush1.msra.mxu0 0.0
    %456 = vmatprep.subr.mxu0 0.0
    %457 = vmatpush1.msra.mxu0 0.0
    %458 = vmatprep.subr.mxu0 0.0
    %459 = vmatpush1.msra.mxu0 0.0
    %460 = vmatprep.mubr.f32.mxu0 0.0
    %461 = vmatmul.mubr.f32.gmra.mrb[0].mxu0 %v62
    %v462 = vpop.f32.mrb[0].mxu0
    %v463 = vadd.f32 0.0, %v462
    %v464 = vpop.f32.mrb[0].mxu0
    %465 = vmatprep.mubr.f32.mxu0 0.0
    %466 = vmatmul.mubr.f32.gmra.mrb[0].mxu0 %v65
    %v467 = vpop.f32.mrb[0].mxu0
    %v468 = vadd.f32 0.0, %v467
    %v469 = vpop.f32.mrb[0].mxu0
    %470 = vdwg.mxu0
    %471 = vmatprep.subr.mxu0 0.0
    %472 = vmatpush1.msra.mxu0 %v392
    %473 = vmatprep.subr.mxu0 0.0
    %474 = vmatpush1.msra.mxu0 %v393
    %475 = vmatprep.subr.mxu0 0.0
    %476 = vmatpush1.msra.mxu0 %v394
    %477 = vmatprep.subr.mxu0 0.0
    %478 = vmatpush1.msra.mxu0 %v395
    %479 = vmatprep.subr.mxu0 0.0
    %480 = vmatpush1.msra.mxu0 0.0
    %481 = vmatprep.subr.mxu0 0.0
    %482 = vmatpush1.msra.mxu0 0.0
    %483 = vmatprep.subr.mxu0 0.0
    %484 = vmatpush1.msra.mxu0 0.0
    %485 = vmatprep.subr.mxu0 0.0
    %486 = vmatpush1.msra.mxu0 0.0
    %487 = vmatprep.subr.mxu0 0.0
    %488 = vmatpush1.msra.mxu0 0.0
    %489 = vmatprep.subr.mxu0 0.0
    %490 = vmatpush1.msra.mxu0 0.0
    %491 = vmatprep.subr.mxu0 0.0
    %492 = vmatpush1.msra.mxu0 0.0
    %493 = vmatprep.subr.mxu0 0.0
    %494 = vmatpush1.msra.mxu0 0.0
    %495 = vmatprep.subr.mxu0 0.0
    %496 = vmatpush1.msra.mxu0 0.0
    %497 = vmatprep.subr.mxu0 0.0
    %498 = vmatpush1.msra.mxu0 0.0
    %499 = vmatprep.subr.mxu0 0.0
    %500 = vmatpush1.msra.mxu0 0.0
    %501 = vmatprep.subr.mxu0 0.0
    %502 = vmatpush1.msra.mxu0 0.0
    %503 = vmatprep.subr.mxu0 0.0
    %504 = vmatpush1.msra.mxu0 0.0
    %505 = vmatprep.subr.mxu0 0.0
    %506 = vmatpush1.msra.mxu0 0.0
    %507 = vmatprep.subr.mxu0 0.0
    %508 = vmatpush1.msra.mxu0 0.0
    %509 = vmatprep.subr.mxu0 0.0
    %510 = vmatpush1.msra.mxu0 0.0
    %511 = vmatprep.subr.mxu0 0.0
    %512 = vmatpush1.msra.mxu0 0.0
    %513 = vmatprep.subr.mxu0 0.0
    %514 = vmatpush1.msra.mxu0 0.0
    %515 = vmatprep.subr.mxu0 0.0
    %516 = vmatpush1.msra.mxu0 0.0
    %517 = vmatprep.subr.mxu0 0.0
    %518 = vmatpush1.msra.mxu0 0.0
    %519 = vmatprep.subr.mxu0 0.0
    %520 = vmatpush1.msra.mxu0 0.0
    %521 = vmatprep.subr.mxu0 0.0
    %522 = vmatpush1.msra.mxu0 0.0
    %523 = vmatprep.subr.mxu0 0.0
    %524 = vmatpush1.msra.mxu0 0.0
    %525 = vmatprep.subr.mxu0 0.0
    %526 = vmatpush1.msra.mxu0 0.0
    %527 = vmatprep.subr.mxu0 0.0
    %528 = vmatpush1.msra.mxu0 0.0
    %529 = vmatprep.subr.mxu0 0.0
    %530 = vmatpush1.msra.mxu0 0.0
    %531 = vmatprep.subr.mxu0 0.0
    %532 = vmatpush1.msra.mxu0 0.0
    %533 = vmatprep.subr.mxu0 0.0
    %534 = vmatpush1.msra.mxu0 0.0
    %535 = vmatprep.mubr.f32.mxu0 0.0
    %536 = vmatmul.mubr.f32.gmra.mrb[0].mxu0 %v62
    %v537 = vpop.f32.mrb[0].mxu0
    %v538 = vadd.f32 0.0, %v537
    %v539 = vpop.f32.mrb[0].mxu0
    %540 = vmatprep.mubr.f32.mxu0 0.0
    %541 = vmatmul.mubr.f32.gmra.mrb[0].mxu0 %v65
    %v542 = vpop.f32.mrb[0].mxu0
    %v543 = vadd.f32 0.0, %v542
    %v544 = vpop.f32.mrb[0].mxu0
    %545 = vdwg.mxu0
    %v547 = vsel %vm60, %v463, 0
    %549 = vmatprep.subr.mxu0 0.0
    %550 = vmatpush1.xpose.msra.mxu0 %v62
    %551 = vmatprep.subr.mxu0 0.0
    %552 = vmatpush1.xpose.msra.mxu0 0.0
    %553 = vmatprep.subr.mxu0 0.0
    %554 = vmatpush1.xpose.msra.mxu0 0.0
    %555 = vmatprep.subr.mxu0 0.0
    %556 = vmatpush1.xpose.msra.mxu0 0.0
    %557 = vmatprep.subr.mxu0 0.0
    %558 = vmatpush1.xpose.msra.mxu0 0.0
    %559 = vmatprep.subr.mxu0 0.0
    %560 = vmatpush1.xpose.msra.mxu0 0.0
    %561 = vmatprep.subr.mxu0 0.0
    %562 = vmatpush1.xpose.msra.mxu0 0.0
    %563 = vmatprep.subr.mxu0 0.0
    %564 = vmatpush1.xpose.msra.mxu0 0.0
    %565 = vmatprep.subr.mxu0 0.0
    %566 = vmatpush1.xpose.msra.mxu0 0.0
    %567 = vmatprep.subr.mxu0 0.0
    %568 = vmatpush1.xpose.msra.mxu0 0.0
    %569 = vmatprep.subr.mxu0 0.0
    %570 = vmatpush1.xpose.msra.mxu0 0.0
    %571 = vmatprep.subr.mxu0 0.0
    %572 = vmatpush1.xpose.msra.mxu0 0.0
    %573 = vmatprep.subr.mxu0 0.0
    %574 = vmatpush1.xpose.msra.mxu0 0.0
    %575 = vmatprep.subr.mxu0 0.0
    %576 = vmatpush1.xpose.msra.mxu0 0.0
    %577 = vmatprep.subr.mxu0 0.0
    %578 = vmatpush1.xpose.msra.mxu0 0.0
    %579 = vmatprep.subr.mxu0 0.0
    %580 = vmatpush1.xpose.msra.mxu0 0.0
    %581 = vmatprep.subr.mxu0 0.0
    %582 = vmatpush1.xpose.msra.mxu0 0.0
    %583 = vmatprep.subr.mxu0 0.0
    %584 = vmatpush1.xpose.msra.mxu0 0.0
    %585 = vmatprep.subr.mxu0 0.0
    %586 = vmatpush1.xpose.msra.mxu0 0.0
    %587 = vmatprep.subr.mxu0 0.0
    %588 = vmatpush1.xpose.msra.mxu0 0.0
    %589 = vmatprep.subr.mxu0 0.0
    %590 = vmatpush1.xpose.msra.mxu0 0.0
    %591 = vmatprep.subr.mxu0 0.0
    %592 = vmatpush1.xpose.msra.mxu0 0.0
    %593 = vmatprep.subr.mxu0 0.0
    %594 = vmatpush1.xpose.msra.mxu0 0.0
    %595 = vmatprep.subr.mxu0 0.0
    %596 = vmatpush1.xpose.msra.mxu0 0.0
    %597 = vmatprep.subr.mxu0 0.0
    %598 = vmatpush1.xpose.msra.mxu0 0.0
    %599 = vmatprep.subr.mxu0 0.0
    %600 = vmatpush1.xpose.msra.mxu0 0.0
    %601 = vmatprep.subr.mxu0 0.0
    %602 = vmatpush1.xpose.msra.mxu0 0.0
    %603 = vmatprep.subr.mxu0 0.0
    %604 = vmatpush1.xpose.msra.mxu0 0.0
    %605 = vmatprep.subr.mxu0 0.0
    %606 = vmatpush1.xpose.msra.mxu0 0.0
    %607 = vmatprep.subr.mxu0 0.0
    %608 = vmatpush1.xpose.msra.mxu0 0.0
    %609 = vmatprep.subr.mxu0 0.0
    %610 = vmatpush1.xpose.msra.mxu0 0.0
    %611 = vmatprep.subr.mxu0 0.0
    %612 = vmatpush1.xpose.msra.mxu0 0.0
    %613 = vmatprep.mubr.f32.mxu0 0.0
    %614 = vmatmul.mubr.f32.gmra.mrb[0].mxu0 %v547
    %v615 = vpop.f32.mrb[0].mxu0
    %v616 = vadd.f32 %v50, %v615
    %v617 = vpop.f32.mrb[0].mxu0
    %618 = vdwg.mxu0
    %v620 = vsel %vm60, %v468, 0
    %622 = vmatprep.subr.mxu0 0.0
    %623 = vmatpush1.xpose.msra.mxu0 %v65
    %624 = vmatprep.subr.mxu0 0.0
    %625 = vmatpush1.xpose.msra.mxu0 0.0
    %626 = vmatprep.subr.mxu0 0.0
    %627 = vmatpush1.xpose.msra.mxu0 0.0
    %628 = vmatprep.subr.mxu0 0.0
    %629 = vmatpush1.xpose.msra.mxu0 0.0
    %630 = vmatprep.subr.mxu0 0.0
    %631 = vmatpush1.xpose.msra.mxu0 0.0
    %632 = vmatprep.subr.mxu0 0.0
    %633 = vmatpush1.xpose.msra.mxu0 0.0
    %634 = vmatprep.subr.mxu0 0.0
    %635 = vmatpush1.xpose.msra.mxu0 0.0
    %636 = vmatprep.subr.mxu0 0.0
    %637 = vmatpush1.xpose.msra.mxu0 0.0
    %638 = vmatprep.subr.mxu0 0.0
    %639 = vmatpush1.xpose.msra.mxu0 0.0
    %640 = vmatprep.subr.mxu0 0.0
    %641 = vmatpush1.xpose.msra.mxu0 0.0
    %642 = vmatprep.subr.mxu0 0.0
    %643 = vmatpush1.xpose.msra.mxu0 0.0
    %644 = vmatprep.subr.mxu0 0.0
    %645 = vmatpush1.xpose.msra.mxu0 0.0
    %646 = vmatprep.subr.mxu0 0.0
    %647 = vmatpush1.xpose.msra.mxu0 0.0
    %648 = vmatprep.subr.mxu0 0.0
    %649 = vmatpush1.xpose.msra.mxu0 0.0
    %650 = vmatprep.subr.mxu0 0.0
    %651 = vmatpush1.xpose.msra.mxu0 0.0
    %652 = vmatprep.subr.mxu0 0.0
    %653 = vmatpush1.xpose.msra.mxu0 0.0
    %654 = vmatprep.subr.mxu0 0.0
    %655 = vmatpush1.xpose.msra.mxu0 0.0
    %656 = vmatprep.subr.mxu0 0.0
    %657 = vmatpush1.xpose.msra.mxu0 0.0
    %658 = vmatprep.subr.mxu0 0.0
    %659 = vmatpush1.xpose.msra.mxu0 0.0
    %660 = vmatprep.subr.mxu0 0.0
    %661 = vmatpush1.xpose.msra.mxu0 0.0
    %662 = vmatprep.subr.mxu0 0.0
    %663 = vmatpush1.xpose.msra.mxu0 0.0
    %664 = vmatprep.subr.mxu0 0.0
    %665 = vmatpush1.xpose.msra.mxu0 0.0
    %666 = vmatprep.subr.mxu0 0.0
    %667 = vmatpush1.xpose.msra.mxu0 0.0
    %668 = vmatprep.subr.mxu0 0.0
    %669 = vmatpush1.xpose.msra.mxu0 0.0
    %670 = vmatprep.subr.mxu0 0.0
    %671 = vmatpush1.xpose.msra.mxu0 0.0
    %672 = vmatprep.subr.mxu0 0.0
    %673 = vmatpush1.xpose.msra.mxu0 0.0
    %674 = vmatprep.subr.mxu0 0.0
    %675 = vmatpush1.xpose.msra.mxu0 0.0
    %676 = vmatprep.subr.mxu0 0.0
    %677 = vmatpush1.xpose.msra.mxu0 0.0
    %678 = vmatprep.subr.mxu0 0.0
    %679 = vmatpush1.xpose.msra.mxu0 0.0
    %680 = vmatprep.subr.mxu0 0.0
    %681 = vmatpush1.xpose.msra.mxu0 0.0
    %682 = vmatprep.subr.mxu0 0.0
    %683 = vmatpush1.xpose.msra.mxu0 0.0
    %684 = vmatprep.subr.mxu0 0.0
    %685 = vmatpush1.xpose.msra.mxu0 0.0
    %686 = vmatprep.mubr.f32.mxu0 0.0
    %687 = vmatmul.mubr.f32.gmra.mrb[0].mxu0 %v620
    %v688 = vpop.f32.mrb[0].mxu0
    %v689 = vadd.f32 %v50, %v688
    %v690 = vpop.f32.mrb[0].mxu0
    %691 = vdwg.mxu0
    %v692 = vsel %vm363, %v616, -inf
    %693 = vmax.xlane.f32.xlu0 %v692
    %v694 = vpop.xlane.xlu0 %693
    %v695 = vsel %vm363, %v689, -inf
    %696 = vmax.xlane.f32.xlu0 %v695
    %v697 = vpop.xlane.xlu0 %696
    %v698 = vsub.f32 %v616, %v694
    %v699 = vsub.f32 %v689, %v697
    %v700 = vmul.f32 %v698, 1.442695
    %v701 = vpow.pop %v700
    %v702 = vmul.f32 %v699, 1.442695
    %v703 = vpow.pop %v702
    %v704 = vsel %vm363, %v701, 0.0
    %705 = vadd.xlane.f32.xlu0 %v704
    %v706 = vpop.xlane.xlu0 %705
    %v707 = vsel %vm363, %v703, 0.0
    %708 = vadd.xlane.f32.xlu0 %v707
    %v709 = vpop.xlane.xlu0 %708
    %v710 = vrcp.pop %v706
    %v711 = vrcp.pop %v709
    %v712 = vmul.f32 %v701, %v710
    %v713 = vmul.f32 %v703, %v711
    %v715 = vsel %vm363, %v712, 0
    %717 = vmatprep.subr.mxu0 0.0
    %718 = vmatpush1.msra.mxu0 %v538
    %719 = vmatprep.subr.mxu0 0.0
    %720 = vmatpush1.msra.mxu0 0.0
    %721 = vmatprep.subr.mxu0 0.0
    %722 = vmatpush1.msra.mxu0 0.0
    %723 = vmatprep.subr.mxu0 0.0
    %724 = vmatpush1.msra.mxu0 0.0
    %725 = vmatprep.subr.mxu0 0.0
    %726 = vmatpush1.msra.mxu0 0.0
    %727 = vmatprep.subr.mxu0 0.0
    %728 = vmatpush1.msra.mxu0 0.0
    %729 = vmatprep.subr.mxu0 0.0
    %730 = vmatpush1.msra.mxu0 0.0
    %731 = vmatprep.subr.mxu0 0.0
    %732 = vmatpush1.msra.mxu0 0.0
    %733 = vmatprep.subr.mxu0 0.0
    %734 = vmatpush1.msra.mxu0 0.0
    %735 = vmatprep.subr.mxu0 0.0
    %736 = vmatpush1.msra.mxu0 0.0
    %737 = vmatprep.subr.mxu0 0.0
    %738 = vmatpush1.msra.mxu0 0.0
    %739 = vmatprep.subr.mxu0 0.0
    %740 = vmatpush1.msra.mxu0 0.0
    %741 = vmatprep.subr.mxu0 0.0
    %742 = vmatpush1.msra.mxu0 0.0
    %743 = vmatprep.subr.mxu0 0.0
    %744 = vmatpush1.msra.mxu0 0.0
    %745 = vmatprep.subr.mxu0 0.0
    %746 = vmatpush1.msra.mxu0 0.0
    %747 = vmatprep.subr.mxu0 0.0
    %748 = vmatpush1.msra.mxu0 0.0
    %749 = vmatprep.subr.mxu0 0.0
    %750 = vmatpush1.msra.mxu0 0.0
    %751 = vmatprep.subr.mxu0 0.0
    %752 = vmatpush1.msra.mxu0 0.0
    %753 = vmatprep.subr.mxu0 0.0
    %754 = vmatpush1.msra.mxu0 0.0
    %755 = vmatprep.subr.mxu0 0.0
    %756 = vmatpush1.msra.mxu0 0.0
    %757 = vmatprep.subr.mxu0 0.0
    %758 = vmatpush1.msra.mxu0 0.0
    %759 = vmatprep.subr.mxu0 0.0
    %760 = vmatpush1.msra.mxu0 0.0
    %761 = vmatprep.subr.mxu0 0.0
    %762 = vmatpush1.msra.mxu0 0.0
    %763 = vmatprep.subr.mxu0 0.0
    %764 = vmatpush1.msra.mxu0 0.0
    %765 = vmatprep.subr.mxu0 0.0
    %766 = vmatpush1.msra.mxu0 0.0
    %767 = vmatprep.subr.mxu0 0.0
    %768 = vmatpush1.msra.mxu0 0.0
    %769 = vmatprep.subr.mxu0 0.0
    %770 = vmatpush1.msra.mxu0 0.0
    %771 = vmatprep.subr.mxu0 0.0
    %772 = vmatpush1.msra.mxu0 0.0
    %773 = vmatprep.subr.mxu0 0.0
    %774 = vmatpush1.msra.mxu0 0.0
    %775 = vmatprep.subr.mxu0 0.0
    %776 = vmatpush1.msra.mxu0 0.0
    %777 = vmatprep.subr.mxu0 0.0
    %778 = vmatpush1.msra.mxu0 0.0
    %779 = vmatprep.subr.mxu0 0.0
    %780 = vmatpush1.msra.mxu0 0.0
    %781 = vmatprep.mubr.f32.mxu0 0.0
    %782 = vmatmul.mubr.f32.gmra.mrb[0].mxu0 %v715
    %v783 = vpop.f32.mrb[0].mxu0
    %v784 = vadd.f32 0.0, %v783
    %v785 = vpop.f32.mrb[0].mxu0
    %786 = vdwg.mxu0
    %v788 = vsel %vm363, %v713, 0
    %790 = vmatprep.subr.mxu0 0.0
    %791 = vmatpush1.msra.mxu0 %v543
    %792 = vmatprep.subr.mxu0 0.0
    %793 = vmatpush1.msra.mxu0 0.0
    %794 = vmatprep.subr.mxu0 0.0
    %795 = vmatpush1.msra.mxu0 0.0
    %796 = vmatprep.subr.mxu0 0.0
    %797 = vmatpush1.msra.mxu0 0.0
    %798 = vmatprep.subr.mxu0 0.0
    %799 = vmatpush1.msra.mxu0 0.0
    %800 = vmatprep.subr.mxu0 0.0
    %801 = vmatpush1.msra.mxu0 0.0
    %802 = vmatprep.subr.mxu0 0.0
    %803 = vmatpush1.msra.mxu0 0.0
    %804 = vmatprep.subr.mxu0 0.0
    %805 = vmatpush1.msra.mxu0 0.0
    %806 = vmatprep.subr.mxu0 0.0
    %807 = vmatpush1.msra.mxu0 0.0
    %808 = vmatprep.subr.mxu0 0.0
    %809 = vmatpush1.msra.mxu0 0.0
    %810 = vmatprep.subr.mxu0 0.0
    %811 = vmatpush1.msra.mxu0 0.0
    %812 = vmatprep.subr.mxu0 0.0
    %813 = vmatpush1.msra.mxu0 0.0
    %814 = vmatprep.subr.mxu0 0.0
    %815 = vmatpush1.msra.mxu0 0.0
    %816 = vmatprep.subr.mxu0 0.0
    %817 = vmatpush1.msra.mxu0 0.0
    %818 = vmatprep.subr.mxu0 0.0
    %819 = vmatpush1.msra.mxu0 0.0
    %820 = vmatprep.subr.mxu0 0.0
    %821 = vmatpush1.msra.mxu0 0.0
    %822 = vmatprep.subr.mxu0 0.0
    %823 = vmatpush1.msra.mxu0 0.0
    %824 = vmatprep.subr.mxu0 0.0
    %825 = vmatpush1.msra.mxu0 0.0
    %826 = vmatprep.subr.mxu0 0.0
    %827 = vmatpush1.msra.mxu0 0.0
    %828 = vmatprep.subr.mxu0 0.0
    %829 = vmatpush1.msra.mxu0 0.0
    %830 = vmatprep.subr.mxu0 0.0
    %831 = vmatpush1.msra.mxu0 0.0
    %832 = vmatprep.subr.mxu0 0.0
    %833 = vmatpush1.msra.mxu0 0.0
    %834 = vmatprep.subr.mxu0 0.0
    %835 = vmatpush1.msra.mxu0 0.0
    %836 = vmatprep.subr.mxu0 0.0
    %837 = vmatpush1.msra.mxu0 0.0
    %838 = vmatprep.subr.mxu0 0.0
    %839 = vmatpush1.msra.mxu0 0.0
    %840 = vmatprep.subr.mxu0 0.0
    %841 = vmatpush1.msra.mxu0 0.0
    %842 = vmatprep.subr.mxu0 0.0
    %843 = vmatpush1.msra.mxu0 0.0
    %844 = vmatprep.subr.mxu0 0.0
    %845 = vmatpush1.msra.mxu0 0.0
    %846 = vmatprep.subr.mxu0 0.0
    %847 = vmatpush1.msra.mxu0 0.0
    %848 = vmatprep.subr.mxu0 0.0
    %849 = vmatpush1.msra.mxu0 0.0
    %850 = vmatprep.subr.mxu0 0.0
    %851 = vmatpush1.msra.mxu0 0.0
    %852 = vmatprep.subr.mxu0 0.0
    %853 = vmatpush1.msra.mxu0 0.0
    %854 = vmatprep.mubr.f32.mxu0 0.0
    %855 = vmatmul.mubr.f32.gmra.mrb[0].mxu0 %v788
    %v856 = vpop.f32.mrb[0].mxu0
    %v857 = vadd.f32 0.0, %v856
    %v858 = vpop.f32.mrb[0].mxu0
    %859 = vdwg.mxu0
    %v861 = vsel %vm363, %v384, 0
    %863 = vmatprep.subr.mxu0 0.0
    %864 = vmatpush1.msra.mxu0 %v209
    %865 = vmatprep.subr.mxu0 0.0
    %866 = vmatpush1.msra.mxu0 0.0
    %867 = vmatprep.subr.mxu0 0.0
    %868 = vmatpush1.msra.mxu0 0.0
    %869 = vmatprep.subr.mxu0 0.0
    %870 = vmatpush1.msra.mxu0 0.0
    %871 = vmatprep.subr.mxu0 0.0
    %872 = vmatpush1.msra.mxu0 0.0
    %873 = vmatprep.subr.mxu0 0.0
    %874 = vmatpush1.msra.mxu0 0.0
    %875 = vmatprep.subr.mxu0 0.0
    %876 = vmatpush1.msra.mxu0 0.0
    %877 = vmatprep.subr.mxu0 0.0
    %878 = vmatpush1.msra.mxu0 0.0
    %879 = vmatprep.subr.mxu0 0.0
    %880 = vmatpush1.msra.mxu0 0.0
    %881 = vmatprep.subr.mxu0 0.0
    %882 = vmatpush1.msra.mxu0 0.0
    %883 = vmatprep.subr.mxu0 0.0
    %884 = vmatpush1.msra.mxu0 0.0
    %885 = vmatprep.subr.mxu0 0.0
    %886 = vmatpush1.msra.mxu0 0.0
    %887 = vmatprep.subr.mxu0 0.0
    %888 = vmatpush1.msra.mxu0 0.0
    %889 = vmatprep.subr.mxu0 0.0
    %890 = vmatpush1.msra.mxu0 0.0
    %891 = vmatprep.subr.mxu0 0.0
    %892 = vmatpush1.msra.mxu0 0.0
    %893 = vmatprep.subr.mxu0 0.0
    %894 = vmatpush1.msra.mxu0 0.0
    %895 = vmatprep.subr.mxu0 0.0
    %896 = vmatpush1.msra.mxu0 0.0
    %897 = vmatprep.subr.mxu0 0.0
    %898 = vmatpush1.msra.mxu0 0.0
    %899 = vmatprep.subr.mxu0 0.0
    %900 = vmatpush1.msra.mxu0 0.0
    %901 = vmatprep.subr.mxu0 0.0
    %902 = vmatpush1.msra.mxu0 0.0
    %903 = vmatprep.subr.mxu0 0.0
    %904 = vmatpush1.msra.mxu0 0.0
    %905 = vmatprep.subr.mxu0 0.0
    %906 = vmatpush1.msra.mxu0 0.0
    %907 = vmatprep.subr.mxu0 0.0
    %908 = vmatpush1.msra.mxu0 0.0
    %909 = vmatprep.subr.mxu0 0.0
    %910 = vmatpush1.msra.mxu0 0.0
    %911 = vmatprep.subr.mxu0 0.0
    %912 = vmatpush1.msra.mxu0 0.0
    %913 = vmatprep.subr.mxu0 0.0
    %914 = vmatpush1.msra.mxu0 0.0
    %915 = vmatprep.subr.mxu0 0.0
    %916 = vmatpush1.msra.mxu0 0.0
    %917 = vmatprep.subr.mxu0 0.0
    %918 = vmatpush1.msra.mxu0 0.0
    %919 = vmatprep.subr.mxu0 0.0
    %920 = vmatpush1.msra.mxu0 0.0
    %921 = vmatprep.subr.mxu0 0.0
    %922 = vmatpush1.msra.mxu0 0.0
    %923 = vmatprep.subr.mxu0 0.0
    %924 = vmatpush1.msra.mxu0 0.0
    %925 = vmatprep.subr.mxu0 0.0
    %926 = vmatpush1.msra.mxu0 0.0
    %927 = vmatprep.mubr.f32.mxu0 0.0
    %928 = vmatmul.mubr.f32.gmra.mrb[0].mxu0 %v861
    %v929 = vpop.f32.mrb[0].mxu0
    %v930 = vadd.f32 %v784, %v929
    %v931 = vpop.f32.mrb[0].mxu0
    %932 = vdwg.mxu0
    %v934 = vsel %vm363, %v385, 0
    %936 = vmatprep.subr.mxu0 0.0
    %937 = vmatpush1.msra.mxu0 %v214
    %938 = vmatprep.subr.mxu0 0.0
    %939 = vmatpush1.msra.mxu0 0.0
    %940 = vmatprep.subr.mxu0 0.0
    %941 = vmatpush1.msra.mxu0 0.0
    %942 = vmatprep.subr.mxu0 0.0
    %943 = vmatpush1.msra.mxu0 0.0
    %944 = vmatprep.subr.mxu0 0.0
    %945 = vmatpush1.msra.mxu0 0.0
    %946 = vmatprep.subr.mxu0 0.0
    %947 = vmatpush1.msra.mxu0 0.0
    %948 = vmatprep.subr.mxu0 0.0
    %949 = vmatpush1.msra.mxu0 0.0
    %950 = vmatprep.subr.mxu0 0.0
    %951 = vmatpush1.msra.mxu0 0.0
    %952 = vmatprep.subr.mxu0 0.0
    %953 = vmatpush1.msra.mxu0 0.0
    %954 = vmatprep.subr.mxu0 0.0
    %955 = vmatpush1.msra.mxu0 0.0
    %956 = vmatprep.subr.mxu0 0.0
    %957 = vmatpush1.msra.mxu0 0.0
    %958 = vmatprep.subr.mxu0 0.0
    %959 = vmatpush1.msra.mxu0 0.0
    %960 = vmatprep.subr.mxu0 0.0
    %961 = vmatpush1.msra.mxu0 0.0
    %962 = vmatprep.subr.mxu0 0.0
    %963 = vmatpush1.msra.mxu0 0.0
    %964 = vmatprep.subr.mxu0 0.0
    %965 = vmatpush1.msra.mxu0 0.0
    %966 = vmatprep.subr.mxu0 0.0
    %967 = vmatpush1.msra.mxu0 0.0
    %968 = vmatprep.subr.mxu0 0.0
    %969 = vmatpush1.msra.mxu0 0.0
    %970 = vmatprep.subr.mxu0 0.0
    %971 = vmatpush1.msra.mxu0 0.0
    %972 = vmatprep.subr.mxu0 0.0
    %973 = vmatpush1.msra.mxu0 0.0
    %974 = vmatprep.subr.mxu0 0.0
    %975 = vmatpush1.msra.mxu0 0.0
    %976 = vmatprep.subr.mxu0 0.0
    %977 = vmatpush1.msra.mxu0 0.0
    %978 = vmatprep.subr.mxu0 0.0
    %979 = vmatpush1.msra.mxu0 0.0
    %980 = vmatprep.subr.mxu0 0.0
    %981 = vmatpush1.msra.mxu0 0.0
    %982 = vmatprep.subr.mxu0 0.0
    %983 = vmatpush1.msra.mxu0 0.0
    %984 = vmatprep.subr.mxu0 0.0
    %985 = vmatpush1.msra.mxu0 0.0
    %986 = vmatprep.subr.mxu0 0.0
    %987 = vmatpush1.msra.mxu0 0.0
    %988 = vmatprep.subr.mxu0 0.0
    %989 = vmatpush1.msra.mxu0 0.0
    %990 = vmatprep.subr.mxu0 0.0
    %991 = vmatpush1.msra.mxu0 0.0
    %992 = vmatprep.subr.mxu0 0.0
    %993 = vmatpush1.msra.mxu0 0.0
    %994 = vmatprep.subr.mxu0 0.0
    %995 = vmatpush1.msra.mxu0 0.0
    %996 = vmatprep.subr.mxu0 0.0
    %997 = vmatpush1.msra.mxu0 0.0
    %998 = vmatprep.subr.mxu0 0.0
    %999 = vmatpush1.msra.mxu0 0.0
    %1000 = vmatprep.mubr.f32.mxu0 0.0
    %1001 = vmatmul.mubr.f32.gmra.mrb[0].mxu0 %v934
    %v1002 = vpop.f32.mrb[0].mxu0
    %v1003 = vadd.f32 %v857, %v1002
    %v1004 = vpop.f32.mrb[0].mxu0
    %1005 = vdwg.mxu0
    %s1006 = scalar_lea.vmem [#allocation5], 64
    %v1007 = vld [vmem:[%s1006] sm:$0xff]
    %v1008 = vld [vmem:[%s1006 + $0x8] sm:$0xff]
    %v1009 = vld [vmem:[%s1006 + $0x10] sm:$0xff]
    %v1010 = vld [vmem:[%s1006 + $0x18] sm:$0xff]
    %s1011 = scalar_lea.vmem [#allocation5], 192
    %v1012 = vld [vmem:[%s1011] sm:$0xff]
    %v1013 = vld [vmem:[%s1011 + $0x8] sm:$0xff]
    %v1014 = vld [vmem:[%s1011 + $0x10] sm:$0xff]
    %v1015 = vld [vmem:[%s1011 + $0x18] sm:$0xff]
    %1016 = vmatprep.subr.mxu0 0.0
    %1017 = vmatpush1.msra.mxu0 %v1007
    %1018 = vmatprep.subr.mxu0 0.0
    %1019 = vmatpush1.msra.mxu0 %v1008
    %1020 = vmatprep.subr.mxu0 0.0
    %1021 = vmatpush1.msra.mxu0 %v1009
    %1022 = vmatprep.subr.mxu0 0.0
    %1023 = vmatpush1.msra.mxu0 %v1010
    %1024 = vmatprep.subr.mxu0 0.0
    %1025 = vmatpush1.msra.mxu0 0.0
    %1026 = vmatprep.subr.mxu0 0.0
    %1027 = vmatpush1.msra.mxu0 0.0
    %1028 = vmatprep.subr.mxu0 0.0
    %1029 = vmatpush1.msra.mxu0 0.0
    %1030 = vmatprep.subr.mxu0 0.0
    %1031 = vmatpush1.msra.mxu0 0.0
    %1032 = vmatprep.subr.mxu0 0.0
    %1033 = vmatpush1.msra.mxu0 0.0
    %1034 = vmatprep.subr.mxu0 0.0
    %1035 = vmatpush1.msra.mxu0 0.0
    %1036 = vmatprep.subr.mxu0 0.0
    %1037 = vmatpush1.msra.mxu0 0.0
    %1038 = vmatprep.subr.mxu0 0.0
    %1039 = vmatpush1.msra.mxu0 0.0
    %1040 = vmatprep.subr.mxu0 0.0
    %1041 = vmatpush1.msra.mxu0 0.0
    %1042 = vmatprep.subr.mxu0 0.0
    %1043 = vmatpush1.msra.mxu0 0.0
    %1044 = vmatprep.subr.mxu0 0.0
    %1045 = vmatpush1.msra.mxu0 0.0
    %1046 = vmatprep.subr.mxu0 0.0
    %1047 = vmatpush1.msra.mxu0 0.0
    %1048 = vmatprep.subr.mxu0 0.0
    %1049 = vmatpush1.msra.mxu0 0.0
    %1050 = vmatprep.subr.mxu0 0.0
    %1051 = vmatpush1.msra.mxu0 0.0
    %1052 = vmatprep.subr.mxu0 0.0
    %1053 = vmatpush1.msra.mxu0 0.0
    %1054 = vmatprep.subr.mxu0 0.0
    %1055 = vmatpush1.msra.mxu0 0.0
    %1056 = vmatprep.subr.mxu0 0.0
    %1057 = vmatpush1.msra.mxu0 0.0
    %1058 = vmatprep.subr.mxu0 0.0
    %1059 = vmatpush1.msra.mxu0 0.0
    %1060 = vmatprep.subr.mxu0 0.0
    %1061 = vmatpush1.msra.mxu0 0.0
    %1062 = vmatprep.subr.mxu0 0.0
    %1063 = vmatpush1.msra.mxu0 0.0
    %1064 = vmatprep.subr.mxu0 0.0
    %1065 = vmatpush1.msra.mxu0 0.0
    %1066 = vmatprep.subr.mxu0 0.0
    %1067 = vmatpush1.msra.mxu0 0.0
    %1068 = vmatprep.subr.mxu0 0.0
    %1069 = vmatpush1.msra.mxu0 0.0
    %1070 = vmatprep.subr.mxu0 0.0
    %1071 = vmatpush1.msra.mxu0 0.0
    %1072 = vmatprep.subr.mxu0 0.0
    %1073 = vmatpush1.msra.mxu0 0.0
    %1074 = vmatprep.subr.mxu0 0.0
    %1075 = vmatpush1.msra.mxu0 0.0
    %1076 = vmatprep.subr.mxu0 0.0
    %1077 = vmatpush1.msra.mxu0 0.0
    %1078 = vmatprep.subr.mxu0 0.0
    %1079 = vmatpush1.msra.mxu0 0.0
    %1080 = vmatprep.mubr.f32.mxu0 0.0
    %1081 = vmatmul.mubr.f32.gmra.mrb[0].mxu0 %v62
    %v1082 = vpop.f32.mrb[0].mxu0
    %v1083 = vadd.f32 0.0, %v1082
    %v1084 = vpop.f32.mrb[0].mxu0
    %1085 = vmatprep.mubr.f32.mxu0 0.0
    %1086 = vmatmul.mubr.f32.gmra.mrb[0].mxu0 %v65
    %v1087 = vpop.f32.mrb[0].mxu0
    %v1088 = vadd.f32 0.0, %v1087
    %v1089 = vpop.f32.mrb[0].mxu0
    %1090 = vdwg.mxu0
    %1091 = vmatprep.subr.mxu0 0.0
    %1092 = vmatpush1.msra.mxu0 %v1012
    %1093 = vmatprep.subr.mxu0 0.0
    %1094 = vmatpush1.msra.mxu0 %v1013
    %1095 = vmatprep.subr.mxu0 0.0
    %1096 = vmatpush1.msra.mxu0 %v1014
    %1097 = vmatprep.subr.mxu0 0.0
    %1098 = vmatpush1.msra.mxu0 %v1015
    %1099 = vmatprep.subr.mxu0 0.0
    %1100 = vmatpush1.msra.mxu0 0.0
    %1101 = vmatprep.subr.mxu0 0.0
    %1102 = vmatpush1.msra.mxu0 0.0
    %1103 = vmatprep.subr.mxu0 0.0
    %1104 = vmatpush1.msra.mxu0 0.0
    %1105 = vmatprep.subr.mxu0 0.0
    %1106 = vmatpush1.msra.mxu0 0.0
    %1107 = vmatprep.subr.mxu0 0.0
    %1108 = vmatpush1.msra.mxu0 0.0
    %1109 = vmatprep.subr.mxu0 0.0
    %1110 = vmatpush1.msra.mxu0 0.0
    %1111 = vmatprep.subr.mxu0 0.0
    %1112 = vmatpush1.msra.mxu0 0.0
    %1113 = vmatprep.subr.mxu0 0.0
    %1114 = vmatpush1.msra.mxu0 0.0
    %1115 = vmatprep.subr.mxu0 0.0
    %1116 = vmatpush1.msra.mxu0 0.0
    %1117 = vmatprep.subr.mxu0 0.0
    %1118 = vmatpush1.msra.mxu0 0.0
    %1119 = vmatprep.subr.mxu0 0.0
    %1120 = vmatpush1.msra.mxu0 0.0
    %1121 = vmatprep.subr.mxu0 0.0
    %1122 = vmatpush1.msra.mxu0 0.0
    %1123 = vmatprep.subr.mxu0 0.0
    %1124 = vmatpush1.msra.mxu0 0.0
    %1125 = vmatprep.subr.mxu0 0.0
    %1126 = vmatpush1.msra.mxu0 0.0
    %1127 = vmatprep.subr.mxu0 0.0
    %1128 = vmatpush1.msra.mxu0 0.0
    %1129 = vmatprep.subr.mxu0 0.0
    %1130 = vmatpush1.msra.mxu0 0.0
    %1131 = vmatprep.subr.mxu0 0.0
    %1132 = vmatpush1.msra.mxu0 0.0
    %1133 = vmatprep.subr.mxu0 0.0
    %1134 = vmatpush1.msra.mxu0 0.0
    %1135 = vmatprep.subr.mxu0 0.0
    %1136 = vmatpush1.msra.mxu0 0.0
    %1137 = vmatprep.subr.mxu0 0.0
    %1138 = vmatpush1.msra.mxu0 0.0
    %1139 = vmatprep.subr.mxu0 0.0
    %1140 = vmatpush1.msra.mxu0 0.0
    %1141 = vmatprep.subr.mxu0 0.0
    %1142 = vmatpush1.msra.mxu0 0.0
    %1143 = vmatprep.subr.mxu0 0.0
    %1144 = vmatpush1.msra.mxu0 0.0
    %1145 = vmatprep.subr.mxu0 0.0
    %1146 = vmatpush1.msra.mxu0 0.0
    %1147 = vmatprep.subr.mxu0 0.0
    %1148 = vmatpush1.msra.mxu0 0.0
    %1149 = vmatprep.subr.mxu0 0.0
    %1150 = vmatpush1.msra.mxu0 0.0
    %1151 = vmatprep.subr.mxu0 0.0
    %1152 = vmatpush1.msra.mxu0 0.0
    %1153 = vmatprep.subr.mxu0 0.0
    %1154 = vmatpush1.msra.mxu0 0.0
    %1155 = vmatprep.mubr.f32.mxu0 0.0
    %1156 = vmatmul.mubr.f32.gmra.mrb[0].mxu0 %v62
    %v1157 = vpop.f32.mrb[0].mxu0
    %v1158 = vadd.f32 0.0, %v1157
    %v1159 = vpop.f32.mrb[0].mxu0
    %1160 = vmatprep.mubr.f32.mxu0 0.0
    %1161 = vmatmul.mubr.f32.gmra.mrb[0].mxu0 %v65
    %v1162 = vpop.f32.mrb[0].mxu0
    %v1163 = vadd.f32 0.0, %v1162
    %v1164 = vpop.f32.mrb[0].mxu0
    %1165 = vdwg.mxu0
    %v1167 = vsel %vm60, %v1083, 0
    %1169 = vmatprep.subr.mxu0 0.0
    %1170 = vmatpush1.xpose.msra.mxu0 %v62
    %1171 = vmatprep.subr.mxu0 0.0
    %1172 = vmatpush1.xpose.msra.mxu0 0.0
    %1173 = vmatprep.subr.mxu0 0.0
    %1174 = vmatpush1.xpose.msra.mxu0 0.0
    %1175 = vmatprep.subr.mxu0 0.0
    %1176 = vmatpush1.xpose.msra.mxu0 0.0
    %1177 = vmatprep.subr.mxu0 0.0
    %1178 = vmatpush1.xpose.msra.mxu0 0.0
    %1179 = vmatprep.subr.mxu0 0.0
    %1180 = vmatpush1.xpose.msra.mxu0 0.0
    %1181 = vmatprep.subr.mxu0 0.0
    %1182 = vmatpush1.xpose.msra.mxu0 0.0
    %1183 = vmatprep.subr.mxu0 0.0
    %1184 = vmatpush1.xpose.msra.mxu0 0.0
    %1185 = vmatprep.subr.mxu0 0.0
    %1186 = vmatpush1.xpose.msra.mxu0 0.0
    %1187 = vmatprep.subr.mxu0 0.0
    %1188 = vmatpush1.xpose.msra.mxu0 0.0
    %1189 = vmatprep.subr.mxu0 0.0
    %1190 = vmatpush1.xpose.msra.mxu0 0.0
    %1191 = vmatprep.subr.mxu0 0.0
    %1192 = vmatpush1.xpose.msra.mxu0 0.0
    %1193 = vmatprep.subr.mxu0 0.0
    %1194 = vmatpush1.xpose.msra.mxu0 0.0
    %1195 = vmatprep.subr.mxu0 0.0
    %1196 = vmatpush1.xpose.msra.mxu0 0.0
    %1197 = vmatprep.subr.mxu0 0.0
    %1198 = vmatpush1.xpose.msra.mxu0 0.0
    %1199 = vmatprep.subr.mxu0 0.0
    %1200 = vmatpush1.xpose.msra.mxu0 0.0
    %1201 = vmatprep.subr.mxu0 0.0
    %1202 = vmatpush1.xpose.msra.mxu0 0.0
    %1203 = vmatprep.subr.mxu0 0.0
    %1204 = vmatpush1.xpose.msra.mxu0 0.0
    %1205 = vmatprep.subr.mxu0 0.0
    %1206 = vmatpush1.xpose.msra.mxu0 0.0
    %1207 = vmatprep.subr.mxu0 0.0
    %1208 = vmatpush1.xpose.msra.mxu0 0.0
    %1209 = vmatprep.subr.mxu0 0.0
    %1210 = vmatpush1.xpose.msra.mxu0 0.0
    %1211 = vmatprep.subr.mxu0 0.0
    %1212 = vmatpush1.xpose.msra.mxu0 0.0
    %1213 = vmatprep.subr.mxu0 0.0
    %1214 = vmatpush1.xpose.msra.mxu0 0.0
    %1215 = vmatprep.subr.mxu0 0.0
    %1216 = vmatpush1.xpose.msra.mxu0 0.0
    %1217 = vmatprep.subr.mxu0 0.0
    %1218 = vmatpush1.xpose.msra.mxu0 0.0
    %1219 = vmatprep.subr.mxu0 0.0
    %1220 = vmatpush1.xpose.msra.mxu0 0.0
    %1221 = vmatprep.subr.mxu0 0.0
    %1222 = vmatpush1.xpose.msra.mxu0 0.0
    %1223 = vmatprep.subr.mxu0 0.0
    %1224 = vmatpush1.xpose.msra.mxu0 0.0
    %1225 = vmatprep.subr.mxu0 0.0
    %1226 = vmatpush1.xpose.msra.mxu0 0.0
    %1227 = vmatprep.subr.mxu0 0.0
    %1228 = vmatpush1.xpose.msra.mxu0 0.0
    %1229 = vmatprep.subr.mxu0 0.0
    %1230 = vmatpush1.xpose.msra.mxu0 0.0
    %1231 = vmatprep.subr.mxu0 0.0
    %1232 = vmatpush1.xpose.msra.mxu0 0.0
    %1233 = vmatprep.mubr.f32.mxu0 0.0
    %1234 = vmatmul.mubr.f32.gmra.mrb[0].mxu0 %v1167
    %v1235 = vpop.f32.mrb[0].mxu0
    %v1236 = vadd.f32 %v50, %v1235
    %v1237 = vpop.f32.mrb[0].mxu0
    %1238 = vdwg.mxu0
    %v1240 = vsel %vm60, %v1088, 0
    %1242 = vmatprep.subr.mxu0 0.0
    %1243 = vmatpush1.xpose.msra.mxu0 %v65
    %1244 = vmatprep.subr.mxu0 0.0
    %1245 = vmatpush1.xpose.msra.mxu0 0.0
    %1246 = vmatprep.subr.mxu0 0.0
    %1247 = vmatpush1.xpose.msra.mxu0 0.0
    %1248 = vmatprep.subr.mxu0 0.0
    %1249 = vmatpush1.xpose.msra.mxu0 0.0
    %1250 = vmatprep.subr.mxu0 0.0
    %1251 = vmatpush1.xpose.msra.mxu0 0.0
    %1252 = vmatprep.subr.mxu0 0.0
    %1253 = vmatpush1.xpose.msra.mxu0 0.0
    %1254 = vmatprep.subr.mxu0 0.0
    %1255 = vmatpush1.xpose.msra.mxu0 0.0
    %1256 = vmatprep.subr.mxu0 0.0
    %1257 = vmatpush1.xpose.msra.mxu0 0.0
    %1258 = vmatprep.subr.mxu0 0.0
    %1259 = vmatpush1.xpose.msra.mxu0 0.0
    %1260 = vmatprep.subr.mxu0 0.0
    %1261 = vmatpush1.xpose.msra.mxu0 0.0
    %1262 = vmatprep.subr.mxu0 0.0
    %1263 = vmatpush1.xpose.msra.mxu0 0.0
    %1264 = vmatprep.subr.mxu0 0.0
    %1265 = vmatpush1.xpose.msra.mxu0 0.0
    %1266 = vmatprep.subr.mxu0 0.0
    %1267 = vmatpush1.xpose.msra.mxu0 0.0
    %1268 = vmatprep.subr.mxu0 0.0
    %1269 = vmatpush1.xpose.msra.mxu0 0.0
    %1270 = vmatprep.subr.mxu0 0.0
    %1271 = vmatpush1.xpose.msra.mxu0 0.0
    %1272 = vmatprep.subr.mxu0 0.0
    %1273 = vmatpush1.xpose.msra.mxu0 0.0
    %1274 = vmatprep.subr.mxu0 0.0
    %1275 = vmatpush1.xpose.msra.mxu0 0.0
    %1276 = vmatprep.subr.mxu0 0.0
    %1277 = vmatpush1.xpose.msra.mxu0 0.0
    %1278 = vmatprep.subr.mxu0 0.0
    %1279 = vmatpush1.xpose.msra.mxu0 0.0
    %1280 = vmatprep.subr.mxu0 0.0
    %1281 = vmatpush1.xpose.msra.mxu0 0.0
    %1282 = vmatprep.subr.mxu0 0.0
    %1283 = vmatpush1.xpose.msra.mxu0 0.0
    %1284 = vmatprep.subr.mxu0 0.0
    %1285 = vmatpush1.xpose.msra.mxu0 0.0
    %1286 = vmatprep.subr.mxu0 0.0
    %1287 = vmatpush1.xpose.msra.mxu0 0.0
    %1288 = vmatprep.subr.mxu0 0.0
    %1289 = vmatpush1.xpose.msra.mxu0 0.0
    %1290 = vmatprep.subr.mxu0 0.0
    %1291 = vmatpush1.xpose.msra.mxu0 0.0
    %1292 = vmatprep.subr.mxu0 0.0
    %1293 = vmatpush1.xpose.msra.mxu0 0.0
    %1294 = vmatprep.subr.mxu0 0.0
    %1295 = vmatpush1.xpose.msra.mxu0 0.0
    %1296 = vmatprep.subr.mxu0 0.0
    %1297 = vmatpush1.xpose.msra.mxu0 0.0
    %1298 = vmatprep.subr.mxu0 0.0
    %1299 = vmatpush1.xpose.msra.mxu0 0.0
    %1300 = vmatprep.subr.mxu0 0.0
    %1301 = vmatpush1.xpose.msra.mxu0 0.0
    %1302 = vmatprep.subr.mxu0 0.0
    %1303 = vmatpush1.xpose.msra.mxu0 0.0
    %1304 = vmatprep.subr.mxu0 0.0
    %1305 = vmatpush1.xpose.msra.mxu0 0.0
    %1306 = vmatprep.mubr.f32.mxu0 0.0
    %1307 = vmatmul.mubr.f32.gmra.mrb[0].mxu0 %v1240
    %v1308 = vpop.f32.mrb[0].mxu0
    %v1309 = vadd.f32 %v50, %v1308
    %v1310 = vpop.f32.mrb[0].mxu0
    %1311 = vdwg.mxu0
    %v1312 = vsel %vm363, %v1236, -inf
    %1313 = vmax.xlane.f32.xlu0 %v1312
    %v1314 = vpop.xlane.xlu0 %1313
    %v1315 = vsel %vm363, %v1309, -inf
    %1316 = vmax.xlane.f32.xlu0 %v1315
    %v1317 = vpop.xlane.xlu0 %1316
    %v1318 = vsub.f32 %v1236, %v1314
    %v1319 = vsub.f32 %v1309, %v1317
    %v1320 = vmul.f32 %v1318, 1.442695
    %v1321 = vpow.pop %v1320
    %v1322 = vmul.f32 %v1319, 1.442695
    %v1323 = vpow.pop %v1322
    %v1324 = vsel %vm363, %v1321, 0.0
    %1325 = vadd.xlane.f32.xlu0 %v1324
    %v1326 = vpop.xlane.xlu0 %1325
    %v1327 = vsel %vm363, %v1323, 0.0
    %1328 = vadd.xlane.f32.xlu0 %v1327
    %v1329 = vpop.xlane.xlu0 %1328
    %v1330 = vrcp.pop %v1326
    %v1331 = vrcp.pop %v1329
    %v1332 = vmul.f32 %v1321, %v1330
    %v1333 = vmul.f32 %v1323, %v1331
    %v1335 = vsel %vm363, %v1332, 0
    %1337 = vmatprep.subr.mxu0 0.0
    %1338 = vmatpush1.msra.mxu0 %v1158
    %1339 = vmatprep.subr.mxu0 0.0
    %1340 = vmatpush1.msra.mxu0 0.0
    %1341 = vmatprep.subr.mxu0 0.0
    %1342 = vmatpush1.msra.mxu0 0.0
    %1343 = vmatprep.subr.mxu0 0.0
    %1344 = vmatpush1.msra.mxu0 0.0
    %1345 = vmatprep.subr.mxu0 0.0
    %1346 = vmatpush1.msra.mxu0 0.0
    %1347 = vmatprep.subr.mxu0 0.0
    %1348 = vmatpush1.msra.mxu0 0.0
    %1349 = vmatprep.subr.mxu0 0.0
    %1350 = vmatpush1.msra.mxu0 0.0
    %1351 = vmatprep.subr.mxu0 0.0
    %1352 = vmatpush1.msra.mxu0 0.0
    %1353 = vmatprep.subr.mxu0 0.0
    %1354 = vmatpush1.msra.mxu0 0.0
    %1355 = vmatprep.subr.mxu0 0.0
    %1356 = vmatpush1.msra.mxu0 0.0
    %1357 = vmatprep.subr.mxu0 0.0
    %1358 = vmatpush1.msra.mxu0 0.0
    %1359 = vmatprep.subr.mxu0 0.0
    %1360 = vmatpush1.msra.mxu0 0.0
    %1361 = vmatprep.subr.mxu0 0.0
    %1362 = vmatpush1.msra.mxu0 0.0
    %1363 = vmatprep.subr.mxu0 0.0
    %1364 = vmatpush1.msra.mxu0 0.0
    %1365 = vmatprep.subr.mxu0 0.0
    %1366 = vmatpush1.msra.mxu0 0.0
    %1367 = vmatprep.subr.mxu0 0.0
    %1368 = vmatpush1.msra.mxu0 0.0
    %1369 = vmatprep.subr.mxu0 0.0
    %1370 = vmatpush1.msra.mxu0 0.0
    %1371 = vmatprep.subr.mxu0 0.0
    %1372 = vmatpush1.msra.mxu0 0.0
    %1373 = vmatprep.subr.mxu0 0.0
    %1374 = vmatpush1.msra.mxu0 0.0
    %1375 = vmatprep.subr.mxu0 0.0
    %1376 = vmatpush1.msra.mxu0 0.0
    %1377 = vmatprep.subr.mxu0 0.0
    %1378 = vmatpush1.msra.mxu0 0.0
    %1379 = vmatprep.subr.mxu0 0.0
    %1380 = vmatpush1.msra.mxu0 0.0
    %1381 = vmatprep.subr.mxu0 0.0
    %1382 = vmatpush1.msra.mxu0 0.0
    %1383 = vmatprep.subr.mxu0 0.0
    %1384 = vmatpush1.msra.mxu0 0.0
    %1385 = vmatprep.subr.mxu0 0.0
    %1386 = vmatpush1.msra.mxu0 0.0
    %1387 = vmatprep.subr.mxu0 0.0
    %1388 = vmatpush1.msra.mxu0 0.0
    %1389 = vmatprep.subr.mxu0 0.0
    %1390 = vmatpush1.msra.mxu0 0.0
    %1391 = vmatprep.subr.mxu0 0.0
    %1392 = vmatpush1.msra.mxu0 0.0
    %1393 = vmatprep.subr.mxu0 0.0
    %1394 = vmatpush1.msra.mxu0 0.0
    %1395 = vmatprep.subr.mxu0 0.0
    %1396 = vmatpush1.msra.mxu0 0.0
    %1397 = vmatprep.subr.mxu0 0.0
    %1398 = vmatpush1.msra.mxu0 0.0
    %1399 = vmatprep.subr.mxu0 0.0
    %1400 = vmatpush1.msra.mxu0 0.0
    %1401 = vmatprep.mubr.f32.mxu0 0.0
    %1402 = vmatmul.mubr.f32.gmra.mrb[0].mxu0 %v1335
    %v1403 = vpop.f32.mrb[0].mxu0
    %v1404 = vadd.f32 0.0, %v1403
    %v1405 = vpop.f32.mrb[0].mxu0
    %1406 = vdwg.mxu0
    %v1408 = vsel %vm363, %v1333, 0
    %1410 = vmatprep.subr.mxu0 0.0
    %1411 = vmatpush1.msra.mxu0 %v1163
    %1412 = vmatprep.subr.mxu0 0.0
    %1413 = vmatpush1.msra.mxu0 0.0
    %1414 = vmatprep.subr.mxu0 0.0
    %1415 = vmatpush1.msra.mxu0 0.0
    %1416 = vmatprep.subr.mxu0 0.0
    %1417 = vmatpush1.msra.mxu0 0.0
    %1418 = vmatprep.subr.mxu0 0.0
    %1419 = vmatpush1.msra.mxu0 0.0
    %1420 = vmatprep.subr.mxu0 0.0
    %1421 = vmatpush1.msra.mxu0 0.0
    %1422 = vmatprep.subr.mxu0 0.0
    %1423 = vmatpush1.msra.mxu0 0.0
    %1424 = vmatprep.subr.mxu0 0.0
    %1425 = vmatpush1.msra.mxu0 0.0
    %1426 = vmatprep.subr.mxu0 0.0
    %1427 = vmatpush1.msra.mxu0 0.0
    %1428 = vmatprep.subr.mxu0 0.0
    %1429 = vmatpush1.msra.mxu0 0.0
    %1430 = vmatprep.subr.mxu0 0.0
    %1431 = vmatpush1.msra.mxu0 0.0
    %1432 = vmatprep.subr.mxu0 0.0
    %1433 = vmatpush1.msra.mxu0 0.0
    %1434 = vmatprep.subr.mxu0 0.0
    %1435 = vmatpush1.msra.mxu0 0.0
    %1436 = vmatprep.subr.mxu0 0.0
    %1437 = vmatpush1.msra.mxu0 0.0
    %1438 = vmatprep.subr.mxu0 0.0
    %1439 = vmatpush1.msra.mxu0 0.0
    %1440 = vmatprep.subr.mxu0 0.0
    %1441 = vmatpush1.msra.mxu0 0.0
    %1442 = vmatprep.subr.mxu0 0.0
    %1443 = vmatpush1.msra.mxu0 0.0
    %1444 = vmatprep.subr.mxu0 0.0
    %1445 = vmatpush1.msra.mxu0 0.0
    %1446 = vmatprep.subr.mxu0 0.0
    %1447 = vmatpush1.msra.mxu0 0.0
    %1448 = vmatprep.subr.mxu0 0.0
    %1449 = vmatpush1.msra.mxu0 0.0
    %1450 = vmatprep.subr.mxu0 0.0
    %1451 = vmatpush1.msra.mxu0 0.0
    %1452 = vmatprep.subr.mxu0 0.0
    %1453 = vmatpush1.msra.mxu0 0.0
    %1454 = vmatprep.subr.mxu0 0.0
    %1455 = vmatpush1.msra.mxu0 0.0
    %1456 = vmatprep.subr.mxu0 0.0
    %1457 = vmatpush1.msra.mxu0 0.0
    %1458 = vmatprep.subr.mxu0 0.0
    %1459 = vmatpush1.msra.mxu0 0.0
    %1460 = vmatprep.subr.mxu0 0.0
    %1461 = vmatpush1.msra.mxu0 0.0
    %1462 = vmatprep.subr.mxu0 0.0
    %1463 = vmatpush1.msra.mxu0 0.0
    %1464 = vmatprep.subr.mxu0 0.0
    %1465 = vmatpush1.msra.mxu0 0.0
    %1466 = vmatprep.subr.mxu0 0.0
    %1467 = vmatpush1.msra.mxu0 0.0
    %1468 = vmatprep.subr.mxu0 0.0
    %1469 = vmatpush1.msra.mxu0 0.0
    %1470 = vmatprep.subr.mxu0 0.0
    %1471 = vmatpush1.msra.mxu0 0.0
    %1472 = vmatprep.subr.mxu0 0.0
    %1473 = vmatpush1.msra.mxu0 0.0
    %1474 = vmatprep.mubr.f32.mxu0 0.0
    %1475 = vmatmul.mubr.f32.gmra.mrb[0].mxu0 %v1408
    %v1476 = vpop.f32.mrb[0].mxu0
    %v1477 = vadd.f32 0.0, %v1476
    %v1478 = vpop.f32.mrb[0].mxu0
    %1479 = vdwg.mxu0
    %v1480 = vadd.f32 %v930, %v1404
    %v1481 = vadd.f32 %v1003, %v1477
    %s1482 = scalar_lea.vmem [#allocation5], 96
    %v1483 = vld [vmem:[%s1482] sm:$0xff]
    %v1484 = vld [vmem:[%s1482 + $0x8] sm:$0xff]
    %v1485 = vld [vmem:[%s1482 + $0x10] sm:$0xff]
    %v1486 = vld [vmem:[%s1482 + $0x18] sm:$0xff]
    %s1487 = scalar_lea.vmem [#allocation5], 224
    %v1488 = vld [vmem:[%s1487] sm:$0xff]
    %v1489 = vld [vmem:[%s1487 + $0x8] sm:$0xff]
    %v1490 = vld [vmem:[%s1487 + $0x10] sm:$0xff]
    %v1491 = vld [vmem:[%s1487 + $0x18] sm:$0xff]
    %1492 = vmatprep.subr.mxu0 0.0
    %1493 = vmatpush1.msra.mxu0 %v1483
    %1494 = vmatprep.subr.mxu0 0.0
    %1495 = vmatpush1.msra.mxu0 %v1484
    %1496 = vmatprep.subr.mxu0 0.0
    %1497 = vmatpush1.msra.mxu0 %v1485
    %1498 = vmatprep.subr.mxu0 0.0
    %1499 = vmatpush1.msra.mxu0 %v1486
    %1500 = vmatprep.subr.mxu0 0.0
    %1501 = vmatpush1.msra.mxu0 0.0
    %1502 = vmatprep.subr.mxu0 0.0
    %1503 = vmatpush1.msra.mxu0 0.0
    %1504 = vmatprep.subr.mxu0 0.0
    %1505 = vmatpush1.msra.mxu0 0.0
    %1506 = vmatprep.subr.mxu0 0.0
    %1507 = vmatpush1.msra.mxu0 0.0
    %1508 = vmatprep.subr.mxu0 0.0
    %1509 = vmatpush1.msra.mxu0 0.0
    %1510 = vmatprep.subr.mxu0 0.0
    %1511 = vmatpush1.msra.mxu0 0.0
    %1512 = vmatprep.subr.mxu0 0.0
    %1513 = vmatpush1.msra.mxu0 0.0
    %1514 = vmatprep.subr.mxu0 0.0
    %1515 = vmatpush1.msra.mxu0 0.0
    %1516 = vmatprep.subr.mxu0 0.0
    %1517 = vmatpush1.msra.mxu0 0.0
    %1518 = vmatprep.subr.mxu0 0.0
    %1519 = vmatpush1.msra.mxu0 0.0
    %1520 = vmatprep.subr.mxu0 0.0
    %1521 = vmatpush1.msra.mxu0 0.0
    %1522 = vmatprep.subr.mxu0 0.0
    %1523 = vmatpush1.msra.mxu0 0.0
    %1524 = vmatprep.subr.mxu0 0.0
    %1525 = vmatpush1.msra.mxu0 0.0
    %1526 = vmatprep.subr.mxu0 0.0
    %1527 = vmatpush1.msra.mxu0 0.0
    %1528 = vmatprep.subr.mxu0 0.0
    %1529 = vmatpush1.msra.mxu0 0.0
    %1530 = vmatprep.subr.mxu0 0.0
    %1531 = vmatpush1.msra.mxu0 0.0
    %1532 = vmatprep.subr.mxu0 0.0
    %1533 = vmatpush1.msra.mxu0 0.0
    %1534 = vmatprep.subr.mxu0 0.0
    %1535 = vmatpush1.msra.mxu0 0.0
    %1536 = vmatprep.subr.mxu0 0.0
    %1537 = vmatpush1.msra.mxu0 0.0
    %1538 = vmatprep.subr.mxu0 0.0
    %1539 = vmatpush1.msra.mxu0 0.0
    %1540 = vmatprep.subr.mxu0 0.0
    %1541 = vmatpush1.msra.mxu0 0.0
    %1542 = vmatprep.subr.mxu0 0.0
    %1543 = vmatpush1.msra.mxu0 0.0
    %1544 = vmatprep.subr.mxu0 0.0
    %1545 = vmatpush1.msra.mxu0 0.0
    %1546 = vmatprep.subr.mxu0 0.0
    %1547 = vmatpush1.msra.mxu0 0.0
    %1548 = vmatprep.subr.mxu0 0.0
    %1549 = vmatpush1.msra.mxu0 0.0
    %1550 = vmatprep.subr.mxu0 0.0
    %1551 = vmatpush1.msra.mxu0 0.0
    %1552 = vmatprep.subr.mxu0 0.0
    %1553 = vmatpush1.msra.mxu0 0.0
    %1554 = vmatprep.subr.mxu0 0.0
    %1555 = vmatpush1.msra.mxu0 0.0
    %1556 = vmatprep.mubr.f32.mxu0 0.0
    %1557 = vmatmul.mubr.f32.gmra.mrb[0].mxu0 %v62
    %v1558 = vpop.f32.mrb[0].mxu0
    %v1559 = vadd.f32 0.0, %v1558
    %v1560 = vpop.f32.mrb[0].mxu0
    %1561 = vmatprep.mubr.f32.mxu0 0.0
    %1562 = vmatmul.mubr.f32.gmra.mrb[0].mxu0 %v65
    %v1563 = vpop.f32.mrb[0].mxu0
    %v1564 = vadd.f32 0.0, %v1563
    %v1565 = vpop.f32.mrb[0].mxu0
    %1566 = vdwg.mxu0
    %1567 = vmatprep.subr.mxu0 0.0
    %1568 = vmatpush1.msra.mxu0 %v1488
    %1569 = vmatprep.subr.mxu0 0.0
    %1570 = vmatpush1.msra.mxu0 %v1489
    %1571 = vmatprep.subr.mxu0 0.0
    %1572 = vmatpush1.msra.mxu0 %v1490
    %1573 = vmatprep.subr.mxu0 0.0
    %1574 = vmatpush1.msra.mxu0 %v1491
    %1575 = vmatprep.subr.mxu0 0.0
    %1576 = vmatpush1.msra.mxu0 0.0
    %1577 = vmatprep.subr.mxu0 0.0
    %1578 = vmatpush1.msra.mxu0 0.0
    %1579 = vmatprep.subr.mxu0 0.0
    %1580 = vmatpush1.msra.mxu0 0.0
    %1581 = vmatprep.subr.mxu0 0.0
    %1582 = vmatpush1.msra.mxu0 0.0
    %1583 = vmatprep.subr.mxu0 0.0
    %1584 = vmatpush1.msra.mxu0 0.0
    %1585 = vmatprep.subr.mxu0 0.0
    %1586 = vmatpush1.msra.mxu0 0.0
    %1587 = vmatprep.subr.mxu0 0.0
    %1588 = vmatpush1.msra.mxu0 0.0
    %1589 = vmatprep.subr.mxu0 0.0
    %1590 = vmatpush1.msra.mxu0 0.0
    %1591 = vmatprep.subr.mxu0 0.0
    %1592 = vmatpush1.msra.mxu0 0.0
    %1593 = vmatprep.subr.mxu0 0.0
    %1594 = vmatpush1.msra.mxu0 0.0
    %1595 = vmatprep.subr.mxu0 0.0
    %1596 = vmatpush1.msra.mxu0 0.0
    %1597 = vmatprep.subr.mxu0 0.0
    %1598 = vmatpush1.msra.mxu0 0.0
    %1599 = vmatprep.subr.mxu0 0.0
    %1600 = vmatpush1.msra.mxu0 0.0
    %1601 = vmatprep.subr.mxu0 0.0
    %1602 = vmatpush1.msra.mxu0 0.0
    %1603 = vmatprep.subr.mxu0 0.0
    %1604 = vmatpush1.msra.mxu0 0.0
    %1605 = vmatprep.subr.mxu0 0.0
    %1606 = vmatpush1.msra.mxu0 0.0
    %1607 = vmatprep.subr.mxu0 0.0
    %1608 = vmatpush1.msra.mxu0 0.0
    %1609 = vmatprep.subr.mxu0 0.0
    %1610 = vmatpush1.msra.mxu0 0.0
    %1611 = vmatprep.subr.mxu0 0.0
    %1612 = vmatpush1.msra.mxu0 0.0
    %1613 = vmatprep.subr.mxu0 0.0
    %1614 = vmatpush1.msra.mxu0 0.0
    %1615 = vmatprep.subr.mxu0 0.0
    %1616 = vmatpush1.msra.mxu0 0.0
    %1617 = vmatprep.subr.mxu0 0.0
    %1618 = vmatpush1.msra.mxu0 0.0
    %1619 = vmatprep.subr.mxu0 0.0
    %1620 = vmatpush1.msra.mxu0 0.0
    %1621 = vmatprep.subr.mxu0 0.0
    %1622 = vmatpush1.msra.mxu0 0.0
    %1623 = vmatprep.subr.mxu0 0.0
    %1624 = vmatpush1.msra.mxu0 0.0
    %1625 = vmatprep.subr.mxu0 0.0
    %1626 = vmatpush1.msra.mxu0 0.0
    %1627 = vmatprep.subr.mxu0 0.0
    %1628 = vmatpush1.msra.mxu0 0.0
    %1629 = vmatprep.subr.mxu0 0.0
    %1630 = vmatpush1.msra.mxu0 0.0
    %1631 = vmatprep.mubr.f32.mxu0 0.0
    %1632 = vmatmul.mubr.f32.gmra.mrb[0].mxu0 %v62
    %v1633 = vpop.f32.mrb[0].mxu0
    %v1634 = vadd.f32 0.0, %v1633
    %v1635 = vpop.f32.mrb[0].mxu0
    %1636 = vmatprep.mubr.f32.mxu0 0.0
    %1637 = vmatmul.mubr.f32.gmra.mrb[0].mxu0 %v65
    %v1638 = vpop.f32.mrb[0].mxu0
    %v1639 = vadd.f32 0.0, %v1638
    %v1640 = vpop.f32.mrb[0].mxu0
    %1641 = vdwg.mxu0
    %v1643 = vsel %vm60, %v1559, 0
    %1645 = vmatprep.subr.mxu0 0.0
    %1646 = vmatpush1.xpose.msra.mxu0 %v62
    %1647 = vmatprep.subr.mxu0 0.0
    %1648 = vmatpush1.xpose.msra.mxu0 0.0
    %1649 = vmatprep.subr.mxu0 0.0
    %1650 = vmatpush1.xpose.msra.mxu0 0.0
    %1651 = vmatprep.subr.mxu0 0.0
    %1652 = vmatpush1.xpose.msra.mxu0 0.0
    %1653 = vmatprep.subr.mxu0 0.0
    %1654 = vmatpush1.xpose.msra.mxu0 0.0
    %1655 = vmatprep.subr.mxu0 0.0
    %1656 = vmatpush1.xpose.msra.mxu0 0.0
    %1657 = vmatprep.subr.mxu0 0.0
    %1658 = vmatpush1.xpose.msra.mxu0 0.0
    %1659 = vmatprep.subr.mxu0 0.0
    %1660 = vmatpush1.xpose.msra.mxu0 0.0
    %1661 = vmatprep.subr.mxu0 0.0
    %1662 = vmatpush1.xpose.msra.mxu0 0.0
    %1663 = vmatprep.subr.mxu0 0.0
    %1664 = vmatpush1.xpose.msra.mxu0 0.0
    %1665 = vmatprep.subr.mxu0 0.0
    %1666 = vmatpush1.xpose.msra.mxu0 0.0
    %1667 = vmatprep.subr.mxu0 0.0
    %1668 = vmatpush1.xpose.msra.mxu0 0.0
    %1669 = vmatprep.subr.mxu0 0.0
    %1670 = vmatpush1.xpose.msra.mxu0 0.0
    %1671 = vmatprep.subr.mxu0 0.0
    %1672 = vmatpush1.xpose.msra.mxu0 0.0
    %1673 = vmatprep.subr.mxu0 0.0
    %1674 = vmatpush1.xpose.msra.mxu0 0.0
    %1675 = vmatprep.subr.mxu0 0.0
    %1676 = vmatpush1.xpose.msra.mxu0 0.0
    %1677 = vmatprep.subr.mxu0 0.0
    %1678 = vmatpush1.xpose.msra.mxu0 0.0
    %1679 = vmatprep.subr.mxu0 0.0
    %1680 = vmatpush1.xpose.msra.mxu0 0.0
    %1681 = vmatprep.subr.mxu0 0.0
    %1682 = vmatpush1.xpose.msra.mxu0 0.0
    %1683 = vmatprep.subr.mxu0 0.0
    %1684 = vmatpush1.xpose.msra.mxu0 0.0
    %1685 = vmatprep.subr.mxu0 0.0
    %1686 = vmatpush1.xpose.msra.mxu0 0.0
    %1687 = vmatprep.subr.mxu0 0.0
    %1688 = vmatpush1.xpose.msra.mxu0 0.0
    %1689 = vmatprep.subr.mxu0 0.0
    %1690 = vmatpush1.xpose.msra.mxu0 0.0
    %1691 = vmatprep.subr.mxu0 0.0
    %1692 = vmatpush1.xpose.msra.mxu0 0.0
    %1693 = vmatprep.subr.mxu0 0.0
    %1694 = vmatpush1.xpose.msra.mxu0 0.0
    %1695 = vmatprep.subr.mxu0 0.0
    %1696 = vmatpush1.xpose.msra.mxu0 0.0
    %1697 = vmatprep.subr.mxu0 0.0
    %1698 = vmatpush1.xpose.msra.mxu0 0.0
    %1699 = vmatprep.subr.mxu0 0.0
    %1700 = vmatpush1.xpose.msra.mxu0 0.0
    %1701 = vmatprep.subr.mxu0 0.0
    %1702 = vmatpush1.xpose.msra.mxu0 0.0
    %1703 = vmatprep.subr.mxu0 0.0
    %1704 = vmatpush1.xpose.msra.mxu0 0.0
    %1705 = vmatprep.subr.mxu0 0.0
    %1706 = vmatpush1.xpose.msra.mxu0 0.0
    %1707 = vmatprep.subr.mxu0 0.0
    %1708 = vmatpush1.xpose.msra.mxu0 0.0
    %1709 = vmatprep.mubr.f32.mxu0 0.0
    %1710 = vmatmul.mubr.f32.gmra.mrb[0].mxu0 %v1643
    %v1711 = vpop.f32.mrb[0].mxu0
    %v1712 = vadd.f32 %v50, %v1711
    %v1713 = vpop.f32.mrb[0].mxu0
    %1714 = vdwg.mxu0
    %v1716 = vsel %vm60, %v1564, 0
    %1718 = vmatprep.subr.mxu0 0.0
    %1719 = vmatpush1.xpose.msra.mxu0 %v65
    %1720 = vmatprep.subr.mxu0 0.0
    %1721 = vmatpush1.xpose.msra.mxu0 0.0
    %1722 = vmatprep.subr.mxu0 0.0
    %1723 = vmatpush1.xpose.msra.mxu0 0.0
    %1724 = vmatprep.subr.mxu0 0.0
    %1725 = vmatpush1.xpose.msra.mxu0 0.0
    %1726 = vmatprep.subr.mxu0 0.0
    %1727 = vmatpush1.xpose.msra.mxu0 0.0
    %1728 = vmatprep.subr.mxu0 0.0
    %1729 = vmatpush1.xpose.msra.mxu0 0.0
    %1730 = vmatprep.subr.mxu0 0.0
    %1731 = vmatpush1.xpose.msra.mxu0 0.0
    %1732 = vmatprep.subr.mxu0 0.0
    %1733 = vmatpush1.xpose.msra.mxu0 0.0
    %1734 = vmatprep.subr.mxu0 0.0
    %1735 = vmatpush1.xpose.msra.mxu0 0.0
    %1736 = vmatprep.subr.mxu0 0.0
    %1737 = vmatpush1.xpose.msra.mxu0 0.0
    %1738 = vmatprep.subr.mxu0 0.0
    %1739 = vmatpush1.xpose.msra.mxu0 0.0
    %1740 = vmatprep.subr.mxu0 0.0
    %1741 = vmatpush1.xpose.msra.mxu0 0.0
    %1742 = vmatprep.subr.mxu0 0.0
    %1743 = vmatpush1.xpose.msra.mxu0 0.0
    %1744 = vmatprep.subr.mxu0 0.0
    %1745 = vmatpush1.xpose.msra.mxu0 0.0
    %1746 = vmatprep.subr.mxu0 0.0
    %1747 = vmatpush1.xpose.msra.mxu0 0.0
    %1748 = vmatprep.subr.mxu0 0.0
    %1749 = vmatpush1.xpose.msra.mxu0 0.0
    %1750 = vmatprep.subr.mxu0 0.0
    %1751 = vmatpush1.xpose.msra.mxu0 0.0
    %1752 = vmatprep.subr.mxu0 0.0
    %1753 = vmatpush1.xpose.msra.mxu0 0.0
    %1754 = vmatprep.subr.mxu0 0.0
    %1755 = vmatpush1.xpose.msra.mxu0 0.0
    %1756 = vmatprep.subr.mxu0 0.0
    %1757 = vmatpush1.xpose.msra.mxu0 0.0
    %1758 = vmatprep.subr.mxu0 0.0
    %1759 = vmatpush1.xpose.msra.mxu0 0.0
    %1760 = vmatprep.subr.mxu0 0.0
    %1761 = vmatpush1.xpose.msra.mxu0 0.0
    %1762 = vmatprep.subr.mxu0 0.0
    %1763 = vmatpush1.xpose.msra.mxu0 0.0
    %1764 = vmatprep.subr.mxu0 0.0
    %1765 = vmatpush1.xpose.msra.mxu0 0.0
    %1766 = vmatprep.subr.mxu0 0.0
    %1767 = vmatpush1.xpose.msra.mxu0 0.0
    %1768 = vmatprep.subr.mxu0 0.0
    %1769 = vmatpush1.xpose.msra.mxu0 0.0
    %1770 = vmatprep.subr.mxu0 0.0
    %1771 = vmatpush1.xpose.msra.mxu0 0.0
    %1772 = vmatprep.subr.mxu0 0.0
    %1773 = vmatpush1.xpose.msra.mxu0 0.0
    %1774 = vmatprep.subr.mxu0 0.0
    %1775 = vmatpush1.xpose.msra.mxu0 0.0
    %1776 = vmatprep.subr.mxu0 0.0
    %1777 = vmatpush1.xpose.msra.mxu0 0.0
    %1778 = vmatprep.subr.mxu0 0.0
    %1779 = vmatpush1.xpose.msra.mxu0 0.0
    %1780 = vmatprep.subr.mxu0 0.0
    %1781 = vmatpush1.xpose.msra.mxu0 0.0
    %1782 = vmatprep.mubr.f32.mxu0 0.0
    %1783 = vmatmul.mubr.f32.gmra.mrb[0].mxu0 %v1716
    %v1784 = vpop.f32.mrb[0].mxu0
    %v1785 = vadd.f32 %v50, %v1784
    %v1786 = vpop.f32.mrb[0].mxu0
    %1787 = vdwg.mxu0
    %v1788 = vsel %vm363, %v1712, -inf
    %1789 = vmax.xlane.f32.xlu0 %v1788
    %v1790 = vpop.xlane.xlu0 %1789
    %v1791 = vsel %vm363, %v1785, -inf
    %1792 = vmax.xlane.f32.xlu0 %v1791
    %v1793 = vpop.xlane.xlu0 %1792
    %v1794 = vsub.f32 %v1712, %v1790
    %v1795 = vsub.f32 %v1785, %v1793
    %v1796 = vmul.f32 %v1794, 1.442695
    %v1797 = vpow.pop %v1796
    %v1798 = vmul.f32 %v1795, 1.442695
    %v1799 = vpow.pop %v1798
    %v1800 = vsel %vm363, %v1797, 0.0
    %1801 = vadd.xlane.f32.xlu0 %v1800
    %v1802 = vpop.xlane.xlu0 %1801
    %v1803 = vsel %vm363, %v1799, 0.0
    %1804 = vadd.xlane.f32.xlu0 %v1803
    %v1805 = vpop.xlane.xlu0 %1804
    %v1806 = vrcp.pop %v1802
    %v1807 = vrcp.pop %v1805
    %v1808 = vmul.f32 %v1797, %v1806
    %v1809 = vmul.f32 %v1799, %v1807
    %v1811 = vsel %vm363, %v1808, 0
    %1813 = vmatprep.subr.mxu0 0.0
    %1814 = vmatpush1.msra.mxu0 %v1634
    %1815 = vmatprep.subr.mxu0 0.0
    %1816 = vmatpush1.msra.mxu0 0.0
    %1817 = vmatprep.subr.mxu0 0.0
    %1818 = vmatpush1.msra.mxu0 0.0
    %1819 = vmatprep.subr.mxu0 0.0
    %1820 = vmatpush1.msra.mxu0 0.0
    %1821 = vmatprep.subr.mxu0 0.0
    %1822 = vmatpush1.msra.mxu0 0.0
    %1823 = vmatprep.subr.mxu0 0.0
    %1824 = vmatpush1.msra.mxu0 0.0
    %1825 = vmatprep.subr.mxu0 0.0
    %1826 = vmatpush1.msra.mxu0 0.0
    %1827 = vmatprep.subr.mxu0 0.0
    %1828 = vmatpush1.msra.mxu0 0.0
    %1829 = vmatprep.subr.mxu0 0.0
    %1830 = vmatpush1.msra.mxu0 0.0
    %1831 = vmatprep.subr.mxu0 0.0
    %1832 = vmatpush1.msra.mxu0 0.0
    %1833 = vmatprep.subr.mxu0 0.0
    %1834 = vmatpush1.msra.mxu0 0.0
    %1835 = vmatprep.subr.mxu0 0.0
    %1836 = vmatpush1.msra.mxu0 0.0
    %1837 = vmatprep.subr.mxu0 0.0
    %1838 = vmatpush1.msra.mxu0 0.0
    %1839 = vmatprep.subr.mxu0 0.0
    %1840 = vmatpush1.msra.mxu0 0.0
    %1841 = vmatprep.subr.mxu0 0.0
    %1842 = vmatpush1.msra.mxu0 0.0
    %1843 = vmatprep.subr.mxu0 0.0
    %1844 = vmatpush1.msra.mxu0 0.0
    %1845 = vmatprep.subr.mxu0 0.0
    %1846 = vmatpush1.msra.mxu0 0.0
    %1847 = vmatprep.subr.mxu0 0.0
    %1848 = vmatpush1.msra.mxu0 0.0
    %1849 = vmatprep.subr.mxu0 0.0
    %1850 = vmatpush1.msra.mxu0 0.0
    %1851 = vmatprep.subr.mxu0 0.0
    %1852 = vmatpush1.msra.mxu0 0.0
    %1853 = vmatprep.subr.mxu0 0.0
    %1854 = vmatpush1.msra.mxu0 0.0
    %1855 = vmatprep.subr.mxu0 0.0
    %1856 = vmatpush1.msra.mxu0 0.0
    %1857 = vmatprep.subr.mxu0 0.0
    %1858 = vmatpush1.msra.mxu0 0.0
    %1859 = vmatprep.subr.mxu0 0.0
    %1860 = vmatpush1.msra.mxu0 0.0
    %1861 = vmatprep.subr.mxu0 0.0
    %1862 = vmatpush1.msra.mxu0 0.0
    %1863 = vmatprep.subr.mxu0 0.0
    %1864 = vmatpush1.msra.mxu0 0.0
    %1865 = vmatprep.subr.mxu0 0.0
    %1866 = vmatpush1.msra.mxu0 0.0
    %1867 = vmatprep.subr.mxu0 0.0
    %1868 = vmatpush1.msra.mxu0 0.0
    %1869 = vmatprep.subr.mxu0 0.0
    %1870 = vmatpush1.msra.mxu0 0.0
    %1871 = vmatprep.subr.mxu0 0.0
    %1872 = vmatpush1.msra.mxu0 0.0
    %1873 = vmatprep.subr.mxu0 0.0
    %1874 = vmatpush1.msra.mxu0 0.0
    %1875 = vmatprep.subr.mxu0 0.0
    %1876 = vmatpush1.msra.mxu0 0.0
    %1877 = vmatprep.mubr.f32.mxu0 0.0
    %1878 = vmatmul.mubr.f32.gmra.mrb[0].mxu0 %v1811
    %v1879 = vpop.f32.mrb[0].mxu0
    %v1880 = vadd.f32 0.0, %v1879
    %v1881 = vpop.f32.mrb[0].mxu0
    %1882 = vdwg.mxu0
    %v1884 = vsel %vm363, %v1809, 0
    %1886 = vmatprep.subr.mxu0 0.0
    %1887 = vmatpush1.msra.mxu0 %v1639
    %1888 = vmatprep.subr.mxu0 0.0
    %1889 = vmatpush1.msra.mxu0 0.0
    %1890 = vmatprep.subr.mxu0 0.0
    %1891 = vmatpush1.msra.mxu0 0.0
    %1892 = vmatprep.subr.mxu0 0.0
    %1893 = vmatpush1.msra.mxu0 0.0
    %1894 = vmatprep.subr.mxu0 0.0
    %1895 = vmatpush1.msra.mxu0 0.0
    %1896 = vmatprep.subr.mxu0 0.0
    %1897 = vmatpush1.msra.mxu0 0.0
    %1898 = vmatprep.subr.mxu0 0.0
    %1899 = vmatpush1.msra.mxu0 0.0
    %1900 = vmatprep.subr.mxu0 0.0
    %1901 = vmatpush1.msra.mxu0 0.0
    %1902 = vmatprep.subr.mxu0 0.0
    %1903 = vmatpush1.msra.mxu0 0.0
    %1904 = vmatprep.subr.mxu0 0.0
    %1905 = vmatpush1.msra.mxu0 0.0
    %1906 = vmatprep.subr.mxu0 0.0
    %1907 = vmatpush1.msra.mxu0 0.0
    %1908 = vmatprep.subr.mxu0 0.0
    %1909 = vmatpush1.msra.mxu0 0.0
    %1910 = vmatprep.subr.mxu0 0.0
    %1911 = vmatpush1.msra.mxu0 0.0
    %1912 = vmatprep.subr.mxu0 0.0
    %1913 = vmatpush1.msra.mxu0 0.0
    %1914 = vmatprep.subr.mxu0 0.0
    %1915 = vmatpush1.msra.mxu0 0.0
    %1916 = vmatprep.subr.mxu0 0.0
    %1917 = vmatpush1.msra.mxu0 0.0
    %1918 = vmatprep.subr.mxu0 0.0
    %1919 = vmatpush1.msra.mxu0 0.0
    %1920 = vmatprep.subr.mxu0 0.0
    %1921 = vmatpush1.msra.mxu0 0.0
    %1922 = vmatprep.subr.mxu0 0.0
    %1923 = vmatpush1.msra.mxu0 0.0
    %1924 = vmatprep.subr.mxu0 0.0
    %1925 = vmatpush1.msra.mxu0 0.0
    %1926 = vmatprep.subr.mxu0 0.0
    %1927 = vmatpush1.msra.mxu0 0.0
    %1928 = vmatprep.subr.mxu0 0.0
    %1929 = vmatpush1.msra.mxu0 0.0
    %1930 = vmatprep.subr.mxu0 0.0
    %1931 = vmatpush1.msra.mxu0 0.0
    %1932 = vmatprep.subr.mxu0 0.0
    %1933 = vmatpush1.msra.mxu0 0.0
    %1934 = vmatprep.subr.mxu0 0.0
    %1935 = vmatpush1.msra.mxu0 0.0
    %1936 = vmatprep.subr.mxu0 0.0
    %1937 = vmatpush1.msra.mxu0 0.0
    %1938 = vmatprep.subr.mxu0 0.0
    %1939 = vmatpush1.msra.mxu0 0.0
    %1940 = vmatprep.subr.mxu0 0.0
    %1941 = vmatpush1.msra.mxu0 0.0
    %1942 = vmatprep.subr.mxu0 0.0
    %1943 = vmatpush1.msra.mxu0 0.0
    %1944 = vmatprep.subr.mxu0 0.0
    %1945 = vmatpush1.msra.mxu0 0.0
    %1946 = vmatprep.subr.mxu0 0.0
    %1947 = vmatpush1.msra.mxu0 0.0
    %1948 = vmatprep.subr.mxu0 0.0
    %1949 = vmatpush1.msra.mxu0 0.0
    %1950 = vmatprep.mubr.f32.mxu0 0.0
    %1951 = vmatmul.mubr.f32.gmra.mrb[0].mxu0 %v1884
    %v1952 = vpop.f32.mrb[0].mxu0
    %v1953 = vadd.f32 0.0, %v1952
    %v1954 = vpop.f32.mrb[0].mxu0
    %1955 = vdwg.mxu0
    %v1956 = vadd.f32 %v1480, %v1880
    %v1957 = vadd.f32 %v1481, %v1953
    %v1958 = vld [vmem:[%s2] sm:$0x1]
    %v1960 = vlaneseq
    %v1961 = vshrl.u32 %v1960, 7
    %v1962 = vsub.s32 0, %v1961
    %v1963 = vrot.slane %v1958, %v1962
    %v1965 = vadd.f32 %v1956, %v1963
    %v1966 = vadd.f32 %v1957, %v1963
    %1967 = vst.msk [vmem:[#allocation7] sm:$0xff] %vm60, %v1965
    %1968 = vst.msk [vmem:[#allocation7 + $0x8] sm:$0xff] %vm60, %v1966
    // Predicated region
    $region22: #{tpu_custom_call.1} parent=1 // pred_check
      _
    $region23: #{tpu_custom_call.1} parent=1 // pred_check_branch
      %1970 = sbr.rel (0) target = $region25
    $region24: #{tpu_custom_call.1} parent=1 // pred_region
      %s1972 = ssub.s32 256, 256
      %1973 = vsyncadd [#allocation4], %s1972
      %s1974 = sshll.u32 [#allocation7], 4
      %s1975 = int_to_ptr.vmem [resolvable:$true] %s1974
      %1980 = dma.vmem_to_hbm [thread:$0]  %s1975, 256, %s3, [#allocation4], 128, 128, 8
    $region25: #{tpu_custom_call.1} parent=1 // pred_fallthru
      _
    // Predicated region
    $region26: #{tpu_custom_call.1} parent=1 // pred_check
      _
    $region27: #{tpu_custom_call.1} parent=1 // pred_check_branch
      %1982 = sbr.rel (0) target = $region29
    $region28: #{tpu_custom_call.1} parent=1 // pred_region
      %1983 = dma.done [#allocation4], 256
    $region29: #{tpu_custom_call.1} parent=1 // pred_fallthru
      _
    %1984 = vsyncpa [#allocation3], 1
    %1985 = vsyncpa [#allocation6], 1
    %1986 = vsyncpa [#allocation4], 1

</llo_original>
